<compile_context>
chip_gen: v5e
topology: v5e:2x2
jax: 0.10.0
libtpu: 0.0.40
codegen_flags: <defaults>
</compile_context>

<pallas_src>
import numpy as np
import jax
import jax.numpy as jnp
from jax import lax
from jax.experimental import pallas as pl
from jax.experimental.pallas import tpu as pltpu


def _round_up(x, m):
    return (x + m - 1) // m * m


def _pick_tm(m):
    for tm in (1024, 512, 256, 128):
        if m >= tm:
            return tm
    return _round_up(max(m, 1), 8)


# ---------------------------------------------------------------------------
# Pallas kernel: single fused complex GEMM (block weight matrix) + bias add.
# ---------------------------------------------------------------------------
def _complex_gemm_kernel(a_ref, w_ref, b_ref, o_ref):
    # a: (TM, Kc)  w: (Kc, O2)  b: (1, O2)  o: (TM, O2)   -- one wide MXU call.
    o_ref[...] = (
        jnp.dot(a_ref[...], w_ref[...],
                preferred_element_type=jnp.float32,
                precision=lax.Precision.HIGHEST)
        + b_ref[...]
    )


def _complex_gemm(a, w, b, *, tm):
    mpad, kc = a.shape
    o2 = w.shape[1]
    grid = (mpad // tm,)
    flops = 2 * mpad * kc * o2
    bytes_accessed = 4 * (mpad * kc + kc * o2 + o2 + mpad * o2)
    return pl.pallas_call(
        _complex_gemm_kernel,
        out_shape=jax.ShapeDtypeStruct((mpad, o2), jnp.float32),
        grid_spec=pltpu.PrefetchScalarGridSpec(
            num_scalar_prefetch=0,
            grid=grid,
            in_specs=[
                pl.BlockSpec((tm, kc), lambda i: (i, 0)),   # A tile (streamed)
                pl.BlockSpec((kc, o2), lambda i: (0, 0)),   # W (resident)
                pl.BlockSpec((1, o2), lambda i: (0, 0)),    # bias (resident)
            ],
            out_specs=pl.BlockSpec((tm, o2), lambda i: (i, 0)),
        ),
        compiler_params=pltpu.CompilerParams(
            dimension_semantics=("parallel",),       # shards across v7x's 2 TCs
            vmem_limit_bytes=48 * 1024 * 1024,       # fits v7x's 64 MiB VMEM
        ),
        cost_estimate=pl.CostEstimate(
            flops=flops, transcendentals=0, bytes_accessed=bytes_accessed),
    )(a, w, b)


# ---------------------------------------------------------------------------
# Glue: circular padding + im2col + layout plumbing (plain JAX).
# TODO(synk): fuse patch extraction into the kernel (grid over the KH*KW taps
# with VMEM accumulation) to remove the KH*KW x HBM read amplification of the
# JAX-side im2col.
# ---------------------------------------------------------------------------
def _im2col_circular(x, kh, kw, pad, stride):
    # x: (N, C, H, W) float32 -> (N*Ho*Wo, C*kh*kw)
    n, c, _, _ = x.shape
    if pad > 0:
        x = jnp.pad(x, ((0, 0), (0, 0), (pad, pad), (pad, pad)), mode="wrap")
    hp, wp = x.shape[2], x.shape[3]
    ho = (hp - kh) // stride + 1
    wo = (wp - kw) // stride + 1
    slabs = []
    for ki in range(kh):
        for kj in range(kw):
            slabs.append(
                x[:, :, ki:ki + stride * ho:stride, kj:kj + stride * wo:stride])
    # (KH*KW, N, C, Ho, Wo) -> (N, Ho, Wo, C, KH*KW) -> (M, C*KH*KW)
    p = jnp.stack(slabs, axis=0).transpose(1, 3, 4, 2, 0)
    return p.reshape(n * ho * wo, c * kh * kw), (n, ho, wo)


def complex_conv2d(x, w_real, w_imag, b_real, b_imag, *, stride=1, padding=0):
    """x: complex64 (N, C, H, W). Weights: (O, C, KH, KW). Returns complex64 NCHW."""
    o, c, kh, kw = w_real.shape
    xr = jnp.real(x).astype(jnp.float32)
    xi = jnp.imag(x).astype(jnp.float32)

    # Single im2col pass over stacked (real, imag) channels:
    # columns [0:K) come from x.real, [K:2K) from x.imag  (K = C*KH*KW).
    x2 = jnp.concatenate([xr, xi], axis=1)                        # (N, 2C, H, W)
    a, (n, ho, wo) = _im2col_circular(x2, kh, kw, padding, stride)
    m, k2 = a.shape
    k = c * kh * kw

    # Block weight matrix implementing the complex product in one matmul:
    #   [ar ai] @ [[wr,  wi],
    #              [-wi, wr]]  = [ar@wr - ai@wi,  ar@wi + ai@wr] = [real, imag]
    wr = w_real.reshape(o, k).T.astype(jnp.float32)               # (K, O)
    wi = w_imag.reshape(o, k).T.astype(jnp.float32)
    w_blk = jnp.concatenate(
        [jnp.concatenate([wr, wi], axis=1),
         jnp.concatenate([-wi, wr], axis=1)], axis=0)             # (2K, 2O)

    # PyTorch ComplexConv2d bias convention (bias folded into each real conv):
    #   real += (b_real - b_imag),  imag += (b_real + b_imag)
    b_blk = jnp.concatenate([b_real - b_imag, b_real + b_imag]).astype(jnp.float32)

    # Pad to TPU-friendly shapes: lane-dense output (multiple of 128 columns),
    # contraction dim multiple of 8 (f32 sublanes), rows multiple of the M tile.
    o2 = _round_up(2 * o, 128)
    kc = _round_up(k2, 8)
    tm = _pick_tm(m)
    mpad = _round_up(m, tm)

    a_p = jnp.zeros((mpad, kc), jnp.float32).at[:m, :k2].set(a)
    w_p = jnp.zeros((kc, o2), jnp.float32).at[:k2, :2 * o].set(w_blk)
    b_p = jnp.zeros((1, o2), jnp.float32).at[0, :2 * o].set(b_blk)

    out = _complex_gemm(a_p, w_p, b_p, tm=tm)                     # (Mpad, O2)

    out_r = out[:m, :o].reshape(n, ho, wo, o).transpose(0, 3, 1, 2)
    out_i = out[:m, o:2 * o].reshape(n, ho, wo, o).transpose(0, 3, 1, 2)
    return lax.complex(out_r, out_i)


# ---------------------------------------------------------------------------
# Pure-JAX reference (mirrors the PyTorch module exactly, for validation).
# ---------------------------------------------------------------------------
def _ref_conv(x, w, b, stride, padding):
    if padding > 0:
        x = jnp.pad(x, ((0, 0), (0, 0), (padding, padding), (padding, padding)),
                    mode="wrap")
    y = lax.conv_general_dilated(
        x, w, window_strides=(stride, stride), padding="VALID",
        dimension_numbers=("NCHW", "OIHW", "NCHW"),
        precision=lax.Precision.HIGHEST)
    return y + b.reshape(1, -1, 1, 1)


def _ref_complex_conv2d(x, wr, wi, br, bi, stride, padding):
    xr, xi = jnp.real(x), jnp.imag(x)
    rr = _ref_conv(xr, wr, br, stride, padding)   # conv_real(x.real)
    ii = _ref_conv(xi, wi, bi, stride, padding)   # conv_imag(x.imag)
    ri = _ref_conv(xi, wr, br, stride, padding)   # conv_real(x.imag)
    ir = _ref_conv(xr, wi, bi, stride, padding)   # conv_imag(x.real)
    return lax.complex(rr - ii, ri + ir)


if __name__ == "__main__":
    # Small deterministic config: batch=2, in_channels=4, out_channels=8,
    # spatial 16x16, kernel 3x3, stride 1, padding 1, padding_mode='circular'.
    N, C, O, H, W, K = 2, 4, 8, 16, 16, 3
    stride, padding = 1, 1

    key = jax.random.PRNGKey(0)
    k1, k2, k3, k4, k5, k6 = jax.random.split(key, 6)

    # Deterministic "Kaiming-ish" init (synthetic, not a checkpoint load).
    fan_in = C * K * K
    bound = 1.0 / np.sqrt(fan_in)
    w_real = jax.random.uniform(k1, (O, C, K, K), jnp.float32, -bound, bound)
    w_imag = jax.random.uniform(k2, (O, C, K, K), jnp.float32, -bound, bound)
    b_real = jax.random.uniform(k3, (O,), jnp.float32, -bound, bound)
    b_imag = jax.random.uniform(k4, (O,), jnp.float32, -bound, bound)

    xr = jax.random.normal(k5, (N, C, H, W), jnp.float32)
    xi = jax.random.normal(k6, (N, C, H, W), jnp.float32)
    x = lax.complex(xr, xi)  # complex64, NCHW

    out = complex_conv2d(x, w_real, w_imag, b_real, b_imag,
                         stride=stride, padding=padding)
    out = jax.block_until_ready(out)

    ref = _ref_complex_conv2d(x, w_real, w_imag, b_real, b_imag, stride, padding)
    ref = jax.block_until_ready(ref)

    np.testing.assert_allclose(np.asarray(jnp.real(out)), np.asarray(jnp.real(ref)),
                               rtol=1e-3, atol=1e-4)
    np.testing.assert_allclose(np.asarray(jnp.imag(out)), np.asarray(jnp.imag(ref)),
                               rtol=1e-3, atol=1e-4)
    assert out.shape == (N, O, H, W) and out.dtype == jnp.complex64

    print("KERNEL_OK")
</pallas_src>

<mosaic_0001>
module attributes {stable_mosaic.version = 11 : i64} {
  func.func @_complex_gemm_kernel(%arg0: i32, %arg1: memref<512x72xf32, #tpu.memory_space<vmem>>, %arg2: memref<72x128xf32, #tpu.memory_space<vmem>>, %arg3: memref<1x128xf32, #tpu.memory_space<vmem>>, %arg4: memref<512x128xf32, #tpu.memory_space<vmem>>) attributes {dimension_semantics = [#tpu.dimension_semantics<parallel>], iteration_bounds = array<i64: 1>, scalar_prefetch = 0 : i64, scratch_operands = 0 : i64, tpu.core_type = #tpu.core_type<tc>, window_params = [{transform_indices = @transform_0, window_bounds = array<i64: 512, 72>}, {pipeline_mode = #tpu.pipeline_mode<synchronous>, transform_indices = @transform_1, window_bounds = array<i64: 72, 128>}, {pipeline_mode = #tpu.pipeline_mode<synchronous>, transform_indices = @transform_2, window_bounds = array<i64: 1, 128>}, {transform_indices = @transform_3, window_bounds = array<i64: 512, 128>}]} {
    %c0 = arith.constant 0 : index
    %c0_0 = arith.constant 0 : index
    %0 = vector.load %arg1[%c0, %c0_0] : memref<512x72xf32, #tpu.memory_space<vmem>>, vector<512x72xf32>
    %c0_1 = arith.constant 0 : index
    %c0_2 = arith.constant 0 : index
    %1 = vector.load %arg2[%c0_1, %c0_2] : memref<72x128xf32, #tpu.memory_space<vmem>>, vector<72x128xf32>
    %cst = arith.constant dense<0.000000e+00> : vector<512x128xf32>
    %2 = tpu.matmul %0, %1, %cst {dimension_numbers = #tpu.dot_dimension_numbers<[1], [0], [0], [1], [0, 0, 1, 1], [], []>, precision = #tpu.contract_precision<fp32>} : vector<512x72xf32>, vector<72x128xf32>, vector<512x128xf32> -> vector<512x128xf32>
    %c0_3 = arith.constant 0 : index
    %c0_4 = arith.constant 0 : index
    %3 = vector.load %arg3[%c0_3, %c0_4] : memref<1x128xf32, #tpu.memory_space<vmem>>, vector<1x128xf32>
    %4 = vector.broadcast %3 : vector<1x128xf32> to vector<512x128xf32>
    %5 = arith.addf %2, %4 : vector<512x128xf32>
    %c0_5 = arith.constant 0 : index
    %c0_6 = arith.constant 0 : index
    %6 = vector.load %arg4[%c0_5, %c0_6] : memref<512x128xf32, #tpu.memory_space<vmem>>, vector<512x128xf32>
    tpu.vector_store %arg4[%c0_5, %c0_6], %5 {strides = array<i32>} : memref<512x128xf32, #tpu.memory_space<vmem>>, vector<512x128xf32>,
    return
  }
  func.func @transform_0(%arg0: i32) -> (i32, i32) {
    %c0_i32 = arith.constant 0 : i32
    %c0_i32_0 = arith.constant 0 : i32
    return %arg0, %c0_i32 : i32, i32
  }
  func.func @transform_1(%arg0: i32) -> (i32, i32) {
    %c0_i32 = arith.constant 0 : i32
    %c0_i32_0 = arith.constant 0 : i32
    %c0_i32_1 = arith.constant 0 : i32
    return %c0_i32, %c0_i32_0 : i32, i32
  }
  func.func @transform_2(%arg0: i32) -> (i32, i32) {
    %c0_i32 = arith.constant 0 : i32
    %c0_i32_0 = arith.constant 0 : i32
    %c0_i32_1 = arith.constant 0 : i32
    return %c0_i32, %c0_i32_0 : i32, i32
  }
  func.func @transform_3(%arg0: i32) -> (i32, i32) {
    %c0_i32 = arith.constant 0 : i32
    %c0_i32_0 = arith.constant 0 : i32
    return %arg0, %c0_i32 : i32, i32
  }
}

</mosaic_0001>

<llo_original>
// kernel: tpu_custom_call.1
$region0: #{tpu_custom_call.1}
  #allocation0 [shape = 'u32[]', space=smem, size = 0x4, offset = 0x4, fixed_abs, tag = 'smem constant byte address 0x4 - core index']
  #allocation1 [shape = 'u32[72,128]{1,0:T(1,128)}', space=vmem, size = 0x9000, scoped, tag = 'internal scratch']
  %s0 = inlined_call_operand.vmem [shape: f32[512,72], index: 0, kind: input, shape index: {}]
  %s1 = inlined_call_operand.vmem [shape: f32[72,128], index: 1, kind: input, shape index: {}]
  %s2 = inlined_call_operand.vmem [shape: f32[1,128], index: 2, kind: input, shape index: {}]
  %s3 = inlined_call_operand.hbm [shape: f32[512,128], index: 3, kind: output, shape index: {}]
  %s4 = sld [smem:[#allocation0]]
  $region22: #{tpu_custom_call.1} parent=0
    _
  %s6 = ssub.s32 1, %s4
  %s7 = scalar_select 0, %s6, %s4
  $region1: #{tpu_custom_call.1} parent=0
    #allocation2 [shape = 'u8[262144]{0}', space=vmem, size = 0x40000, scoped, tag = 'output window, operand 0, single buffered']
    #allocation3 [shape = 's32[1]{0}', space=sflag, size = 0x4, scoped, tag = 'scoped memory for tpu_custom_call.1']
    %8 = vsyncpa [#allocation3], 0
    // Predicated region
    $region2: #{tpu_custom_call.1} parent=1 // pred_check
      _
    $region3: #{tpu_custom_call.1} parent=1 // pred_check_branch
      %10 = sbr.rel (0) target = $region5
    $region4: #{tpu_custom_call.1} parent=1 // pred_region
      _
    $region5: #{tpu_custom_call.1} parent=1 // pred_fallthru
      _
    // Predicated region
    $region6: #{tpu_custom_call.1} parent=1 // pred_check
      _
    $region7: #{tpu_custom_call.1} parent=1 // pred_check_branch
      %12 = sbr.rel (0) target = $region9
    $region8: #{tpu_custom_call.1} parent=1 // pred_region
      _
    $region9: #{tpu_custom_call.1} parent=1 // pred_fallthru
      _
    // Predicated region
    $region10: #{tpu_custom_call.1} parent=1 // pred_check
      _
    $region11: #{tpu_custom_call.1} parent=1 // pred_check_branch
      %14 = sbr.rel (0) target = $region13
    $region12: #{tpu_custom_call.1} parent=1 // pred_region
      _
    $region13: #{tpu_custom_call.1} parent=1 // pred_fallthru
      _
    %v15 = vld [vmem:[%s0] sm:$0xff]
    %v16 = vld [vmem:[%s0 + $0x8] sm:$0xff]
    %v17 = vld [vmem:[%s0 + $0x10] sm:$0xff]
    %v18 = vld [vmem:[%s0 + $0x18] sm:$0xff]
    %v19 = vld [vmem:[%s0 + $0x20] sm:$0xff]
    %v20 = vld [vmem:[%s0 + $0x28] sm:$0xff]
    %v21 = vld [vmem:[%s0 + $0x30] sm:$0xff]
    %v22 = vld [vmem:[%s0 + $0x38] sm:$0xff]
    %v23 = vld [vmem:[%s0 + $0x40] sm:$0xff]
    %v24 = vld [vmem:[%s0 + $0x48] sm:$0xff]
    %v25 = vld [vmem:[%s0 + $0x50] sm:$0xff]
    %v26 = vld [vmem:[%s0 + $0x58] sm:$0xff]
    %v27 = vld [vmem:[%s0 + $0x60] sm:$0xff]
    %v28 = vld [vmem:[%s0 + $0x68] sm:$0xff]
    %v29 = vld [vmem:[%s0 + $0x70] sm:$0xff]
    %v30 = vld [vmem:[%s0 + $0x78] sm:$0xff]
    %v31 = vld [vmem:[%s0 + $0x80] sm:$0xff]
    %v32 = vld [vmem:[%s0 + $0x88] sm:$0xff]
    %v33 = vld [vmem:[%s0 + $0x90] sm:$0xff]
    %v34 = vld [vmem:[%s0 + $0x98] sm:$0xff]
    %v35 = vld [vmem:[%s0 + $0xa0] sm:$0xff]
    %v36 = vld [vmem:[%s0 + $0xa8] sm:$0xff]
    %v37 = vld [vmem:[%s0 + $0xb0] sm:$0xff]
    %v38 = vld [vmem:[%s0 + $0xb8] sm:$0xff]
    %v39 = vld [vmem:[%s0 + $0xc0] sm:$0xff]
    %v40 = vld [vmem:[%s0 + $0xc8] sm:$0xff]
    %v41 = vld [vmem:[%s0 + $0xd0] sm:$0xff]
    %v42 = vld [vmem:[%s0 + $0xd8] sm:$0xff]
    %v43 = vld [vmem:[%s0 + $0xe0] sm:$0xff]
    %v44 = vld [vmem:[%s0 + $0xe8] sm:$0xff]
    %v45 = vld [vmem:[%s0 + $0xf0] sm:$0xff]
    %v46 = vld [vmem:[%s0 + $0xf8] sm:$0xff]
    %v47 = vld [vmem:[%s0 + $0x100] sm:$0xff]
    %v48 = vld [vmem:[%s0 + $0x108] sm:$0xff]
    %v49 = vld [vmem:[%s0 + $0x110] sm:$0xff]
    %v50 = vld [vmem:[%s0 + $0x118] sm:$0xff]
    %v51 = vld [vmem:[%s0 + $0x120] sm:$0xff]
    %v52 = vld [vmem:[%s0 + $0x128] sm:$0xff]
    %v53 = vld [vmem:[%s0 + $0x130] sm:$0xff]
    %v54 = vld [vmem:[%s0 + $0x138] sm:$0xff]
    %v55 = vld [vmem:[%s0 + $0x140] sm:$0xff]
    %v56 = vld [vmem:[%s0 + $0x148] sm:$0xff]
    %v57 = vld [vmem:[%s0 + $0x150] sm:$0xff]
    %v58 = vld [vmem:[%s0 + $0x158] sm:$0xff]
    %v59 = vld [vmem:[%s0 + $0x160] sm:$0xff]
    %v60 = vld [vmem:[%s0 + $0x168] sm:$0xff]
    %v61 = vld [vmem:[%s0 + $0x170] sm:$0xff]
    %v62 = vld [vmem:[%s0 + $0x178] sm:$0xff]
    %v63 = vld [vmem:[%s0 + $0x180] sm:$0xff]
    %v64 = vld [vmem:[%s0 + $0x188] sm:$0xff]
    %v65 = vld [vmem:[%s0 + $0x190] sm:$0xff]
    %v66 = vld [vmem:[%s0 + $0x198] sm:$0xff]
    %v67 = vld [vmem:[%s0 + $0x1a0] sm:$0xff]
    %v68 = vld [vmem:[%s0 + $0x1a8] sm:$0xff]
    %v69 = vld [vmem:[%s0 + $0x1b0] sm:$0xff]
    %v70 = vld [vmem:[%s0 + $0x1b8] sm:$0xff]
    %v71 = vld [vmem:[%s0 + $0x1c0] sm:$0xff]
    %v72 = vld [vmem:[%s0 + $0x1c8] sm:$0xff]
    %v73 = vld [vmem:[%s0 + $0x1d0] sm:$0xff]
    %v74 = vld [vmem:[%s0 + $0x1d8] sm:$0xff]
    %v75 = vld [vmem:[%s0 + $0x1e0] sm:$0xff]
    %v76 = vld [vmem:[%s0 + $0x1e8] sm:$0xff]
    %v77 = vld [vmem:[%s0 + $0x1f0] sm:$0xff]
    %v78 = vld [vmem:[%s0 + $0x1f8] sm:$0xff]
    %v79 = vld [vmem:[%s1] sm:$0xff]
    %v80 = vld [vmem:[%s1 + $0x8] sm:$0xff]
    %v81 = vld [vmem:[%s1 + $0x10] sm:$0xff]
    %v82 = vld [vmem:[%s1 + $0x18] sm:$0xff]
    %v83 = vld [vmem:[%s1 + $0x20] sm:$0xff]
    %v84 = vld [vmem:[%s1 + $0x28] sm:$0xff]
    %v85 = vld [vmem:[%s1 + $0x30] sm:$0xff]
    %v86 = vld [vmem:[%s1 + $0x38] sm:$0xff]
    %v87 = vld [vmem:[%s1 + $0x40] sm:$0xff]
    %v88 = vld [vmem:[%s2] sm:$0x1]
    %v90 = vperm.slane %v88, 0
    %vm92 = vcmask 588800
    %v94 = vsel %vm92, %v15, 0
    %v97 = vsel %vm92, %v16, 0
    %v100 = vsel %vm92, %v17, 0
    %v103 = vsel %vm92, %v18, 0
    %v106 = vsel %vm92, %v19, 0
    %v109 = vsel %vm92, %v20, 0
    %v112 = vsel %vm92, %v21, 0
    %v115 = vsel %vm92, %v22, 0
    %v118 = vsel %vm92, %v23, 0
    %v121 = vsel %vm92, %v24, 0
    %v124 = vsel %vm92, %v25, 0
    %v127 = vsel %vm92, %v26, 0
    %v130 = vsel %vm92, %v27, 0
    %v133 = vsel %vm92, %v28, 0
    %v136 = vsel %vm92, %v29, 0
    %v139 = vsel %vm92, %v30, 0
    %v142 = vsel %vm92, %v31, 0
    %v145 = vsel %vm92, %v32, 0
    %v148 = vsel %vm92, %v33, 0
    %v151 = vsel %vm92, %v34, 0
    %v154 = vsel %vm92, %v35, 0
    %v157 = vsel %vm92, %v36, 0
    %v160 = vsel %vm92, %v37, 0
    %v163 = vsel %vm92, %v38, 0
    %v166 = vsel %vm92, %v39, 0
    %v169 = vsel %vm92, %v40, 0
    %v172 = vsel %vm92, %v41, 0
    %v175 = vsel %vm92, %v42, 0
    %v178 = vsel %vm92, %v43, 0
    %v181 = vsel %vm92, %v44, 0
    %v184 = vsel %vm92, %v45, 0
    %v187 = vsel %vm92, %v46, 0
    %v190 = vsel %vm92, %v47, 0
    %v193 = vsel %vm92, %v48, 0
    %v196 = vsel %vm92, %v49, 0
    %v199 = vsel %vm92, %v50, 0
    %v202 = vsel %vm92, %v51, 0
    %v205 = vsel %vm92, %v52, 0
    %v208 = vsel %vm92, %v53, 0
    %v211 = vsel %vm92, %v54, 0
    %v214 = vsel %vm92, %v55, 0
    %v217 = vsel %vm92, %v56, 0
    %v220 = vsel %vm92, %v57, 0
    %v223 = vsel %vm92, %v58, 0
    %v226 = vsel %vm92, %v59, 0
    %v229 = vsel %vm92, %v60, 0
    %v232 = vsel %vm92, %v61, 0
    %v235 = vsel %vm92, %v62, 0
    %v238 = vsel %vm92, %v63, 0
    %v241 = vsel %vm92, %v64, 0
    %v244 = vsel %vm92, %v65, 0
    %v247 = vsel %vm92, %v66, 0
    %v250 = vsel %vm92, %v67, 0
    %v253 = vsel %vm92, %v68, 0
    %v256 = vsel %vm92, %v69, 0
    %v259 = vsel %vm92, %v70, 0
    %v262 = vsel %vm92, %v71, 0
    %v265 = vsel %vm92, %v72, 0
    %v268 = vsel %vm92, %v73, 0
    %v271 = vsel %vm92, %v74, 0
    %v274 = vsel %vm92, %v75, 0
    %v277 = vsel %vm92, %v76, 0
    %v280 = vsel %vm92, %v77, 0
    %v283 = vsel %vm92, %v78, 0
    %285 = vmatpush.msra.mxu0 0.0
    %286 = vmatpush.msra.mxu0 0.0
    %287 = vmatpush.msra.mxu0 0.0
    %288 = vmatpush.msra.mxu0 0.0
    %289 = vmatpush.msra.mxu0 0.0
    %290 = vmatpush.msra.mxu0 0.0
    %291 = vmatpush.msra.mxu0 0.0
    %v292 = vand.u32 %v87, 4294901760
    %293 = vmatpush.msra.mxu0 %v292
    %v294 = vand.u32 %v86, 4294901760
    %295 = vmatpush.msra.mxu0 %v294
    %v296 = vand.u32 %v85, 4294901760
    %297 = vmatpush.msra.mxu0 %v296
    %v298 = vand.u32 %v84, 4294901760
    %299 = vmatpush.msra.mxu0 %v298
    %v300 = vand.u32 %v83, 4294901760
    %301 = vmatpush.msra.mxu0 %v300
    %v302 = vand.u32 %v82, 4294901760
    %303 = vmatpush.msra.mxu0 %v302
    %v304 = vand.u32 %v81, 4294901760
    %305 = vmatpush.msra.mxu0 %v304
    %v306 = vand.u32 %v80, 4294901760
    %307 = vmatpush.msra.mxu0 %v306
    %v308 = vand.u32 %v79, 4294901760
    %309 = vmatpush.msra.mxu0 %v308
    %v310 = vand.u32 %v94, 4294901760
    %v311 = vsub.f32 %v94, %v310
    %v312 = vand.u32 %v311, 4294901760
    %v313 = vsub.f32 %v311, %v312
    %v314 = vand.u32 %v313, 4294901760
    %315 = vmatmul.f32.gmra.mxu0 %v314
    %v316 = vpop.f32.mrf.mxu0
    %v317 = vadd.f32 %v90, %v316
    %v318 = vand.u32 %v97, 4294901760
    %v319 = vsub.f32 %v97, %v318
    %v320 = vand.u32 %v319, 4294901760
    %v321 = vsub.f32 %v319, %v320
    %v322 = vand.u32 %v321, 4294901760
    %323 = vmatmul.f32.gmra.mxu0 %v322
    %v324 = vpop.f32.mrf.mxu0
    %v325 = vadd.f32 %v90, %v324
    %v326 = vand.u32 %v100, 4294901760
    %v327 = vsub.f32 %v100, %v326
    %v328 = vand.u32 %v327, 4294901760
    %v329 = vsub.f32 %v327, %v328
    %v330 = vand.u32 %v329, 4294901760
    %331 = vmatmul.f32.gmra.mxu0 %v330
    %v332 = vpop.f32.mrf.mxu0
    %v333 = vadd.f32 %v90, %v332
    %v334 = vand.u32 %v103, 4294901760
    %v335 = vsub.f32 %v103, %v334
    %v336 = vand.u32 %v335, 4294901760
    %v337 = vsub.f32 %v335, %v336
    %v338 = vand.u32 %v337, 4294901760
    %339 = vmatmul.f32.gmra.mxu0 %v338
    %v340 = vpop.f32.mrf.mxu0
    %v341 = vadd.f32 %v90, %v340
    %v342 = vand.u32 %v106, 4294901760
    %v343 = vsub.f32 %v106, %v342
    %v344 = vand.u32 %v343, 4294901760
    %v345 = vsub.f32 %v343, %v344
    %v346 = vand.u32 %v345, 4294901760
    %347 = vmatmul.f32.gmra.mxu0 %v346
    %v348 = vpop.f32.mrf.mxu0
    %v349 = vadd.f32 %v90, %v348
    %v350 = vand.u32 %v109, 4294901760
    %v351 = vsub.f32 %v109, %v350
    %v352 = vand.u32 %v351, 4294901760
    %v353 = vsub.f32 %v351, %v352
    %v354 = vand.u32 %v353, 4294901760
    %355 = vmatmul.f32.gmra.mxu0 %v354
    %v356 = vpop.f32.mrf.mxu0
    %v357 = vadd.f32 %v90, %v356
    %v358 = vand.u32 %v112, 4294901760
    %v359 = vsub.f32 %v112, %v358
    %v360 = vand.u32 %v359, 4294901760
    %v361 = vsub.f32 %v359, %v360
    %v362 = vand.u32 %v361, 4294901760
    %363 = vmatmul.f32.gmra.mxu0 %v362
    %v364 = vpop.f32.mrf.mxu0
    %v365 = vadd.f32 %v90, %v364
    %v366 = vand.u32 %v115, 4294901760
    %v367 = vsub.f32 %v115, %v366
    %v368 = vand.u32 %v367, 4294901760
    %v369 = vsub.f32 %v367, %v368
    %v370 = vand.u32 %v369, 4294901760
    %371 = vmatmul.f32.gmra.mxu0 %v370
    %v372 = vpop.f32.mrf.mxu0
    %v373 = vadd.f32 %v90, %v372
    %v374 = vand.u32 %v118, 4294901760
    %v375 = vsub.f32 %v118, %v374
    %v376 = vand.u32 %v375, 4294901760
    %v377 = vsub.f32 %v375, %v376
    %v378 = vand.u32 %v377, 4294901760
    %379 = vmatmul.f32.gmra.mxu0 %v378
    %v380 = vpop.f32.mrf.mxu0
    %v381 = vadd.f32 %v90, %v380
    %v382 = vand.u32 %v121, 4294901760
    %v383 = vsub.f32 %v121, %v382
    %v384 = vand.u32 %v383, 4294901760
    %v385 = vsub.f32 %v383, %v384
    %v386 = vand.u32 %v385, 4294901760
    %387 = vmatmul.f32.gmra.mxu0 %v386
    %v388 = vpop.f32.mrf.mxu0
    %v389 = vadd.f32 %v90, %v388
    %v390 = vand.u32 %v124, 4294901760
    %v391 = vsub.f32 %v124, %v390
    %v392 = vand.u32 %v391, 4294901760
    %v393 = vsub.f32 %v391, %v392
    %v394 = vand.u32 %v393, 4294901760
    %395 = vmatmul.f32.gmra.mxu0 %v394
    %v396 = vpop.f32.mrf.mxu0
    %v397 = vadd.f32 %v90, %v396
    %v398 = vand.u32 %v127, 4294901760
    %v399 = vsub.f32 %v127, %v398
    %v400 = vand.u32 %v399, 4294901760
    %v401 = vsub.f32 %v399, %v400
    %v402 = vand.u32 %v401, 4294901760
    %403 = vmatmul.f32.gmra.mxu0 %v402
    %v404 = vpop.f32.mrf.mxu0
    %v405 = vadd.f32 %v90, %v404
    %v406 = vand.u32 %v130, 4294901760
    %v407 = vsub.f32 %v130, %v406
    %v408 = vand.u32 %v407, 4294901760
    %v409 = vsub.f32 %v407, %v408
    %v410 = vand.u32 %v409, 4294901760
    %411 = vmatmul.f32.gmra.mxu0 %v410
    %v412 = vpop.f32.mrf.mxu0
    %v413 = vadd.f32 %v90, %v412
    %v414 = vand.u32 %v133, 4294901760
    %v415 = vsub.f32 %v133, %v414
    %v416 = vand.u32 %v415, 4294901760
    %v417 = vsub.f32 %v415, %v416
    %v418 = vand.u32 %v417, 4294901760
    %419 = vmatmul.f32.gmra.mxu0 %v418
    %v420 = vpop.f32.mrf.mxu0
    %v421 = vadd.f32 %v90, %v420
    %v422 = vand.u32 %v136, 4294901760
    %v423 = vsub.f32 %v136, %v422
    %v424 = vand.u32 %v423, 4294901760
    %v425 = vsub.f32 %v423, %v424
    %v426 = vand.u32 %v425, 4294901760
    %427 = vmatmul.f32.gmra.mxu0 %v426
    %v428 = vpop.f32.mrf.mxu0
    %v429 = vadd.f32 %v90, %v428
    %v430 = vand.u32 %v139, 4294901760
    %v431 = vsub.f32 %v139, %v430
    %v432 = vand.u32 %v431, 4294901760
    %v433 = vsub.f32 %v431, %v432
    %v434 = vand.u32 %v433, 4294901760
    %435 = vmatmul.f32.gmra.mxu0 %v434
    %v436 = vpop.f32.mrf.mxu0
    %v437 = vadd.f32 %v90, %v436
    %v438 = vand.u32 %v142, 4294901760
    %v439 = vsub.f32 %v142, %v438
    %v440 = vand.u32 %v439, 4294901760
    %v441 = vsub.f32 %v439, %v440
    %v442 = vand.u32 %v441, 4294901760
    %443 = vmatmul.f32.gmra.mxu0 %v442
    %v444 = vpop.f32.mrf.mxu0
    %v445 = vadd.f32 %v90, %v444
    %v446 = vand.u32 %v145, 4294901760
    %v447 = vsub.f32 %v145, %v446
    %v448 = vand.u32 %v447, 4294901760
    %v449 = vsub.f32 %v447, %v448
    %v450 = vand.u32 %v449, 4294901760
    %451 = vmatmul.f32.gmra.mxu0 %v450
    %v452 = vpop.f32.mrf.mxu0
    %v453 = vadd.f32 %v90, %v452
    %v454 = vand.u32 %v148, 4294901760
    %v455 = vsub.f32 %v148, %v454
    %v456 = vand.u32 %v455, 4294901760
    %v457 = vsub.f32 %v455, %v456
    %v458 = vand.u32 %v457, 4294901760
    %459 = vmatmul.f32.gmra.mxu0 %v458
    %v460 = vpop.f32.mrf.mxu0
    %v461 = vadd.f32 %v90, %v460
    %v462 = vand.u32 %v151, 4294901760
    %v463 = vsub.f32 %v151, %v462
    %v464 = vand.u32 %v463, 4294901760
    %v465 = vsub.f32 %v463, %v464
    %v466 = vand.u32 %v465, 4294901760
    %467 = vmatmul.f32.gmra.mxu0 %v466
    %v468 = vpop.f32.mrf.mxu0
    %v469 = vadd.f32 %v90, %v468
    %v470 = vand.u32 %v154, 4294901760
    %v471 = vsub.f32 %v154, %v470
    %v472 = vand.u32 %v471, 4294901760
    %v473 = vsub.f32 %v471, %v472
    %v474 = vand.u32 %v473, 4294901760
    %475 = vmatmul.f32.gmra.mxu0 %v474
    %v476 = vpop.f32.mrf.mxu0
    %v477 = vadd.f32 %v90, %v476
    %v478 = vand.u32 %v157, 4294901760
    %v479 = vsub.f32 %v157, %v478
    %v480 = vand.u32 %v479, 4294901760
    %v481 = vsub.f32 %v479, %v480
    %v482 = vand.u32 %v481, 4294901760
    %483 = vmatmul.f32.gmra.mxu0 %v482
    %v484 = vpop.f32.mrf.mxu0
    %v485 = vadd.f32 %v90, %v484
    %v486 = vand.u32 %v160, 4294901760
    %v487 = vsub.f32 %v160, %v486
    %v488 = vand.u32 %v487, 4294901760
    %v489 = vsub.f32 %v487, %v488
    %v490 = vand.u32 %v489, 4294901760
    %491 = vmatmul.f32.gmra.mxu0 %v490
    %v492 = vpop.f32.mrf.mxu0
    %v493 = vadd.f32 %v90, %v492
    %v494 = vand.u32 %v163, 4294901760
    %v495 = vsub.f32 %v163, %v494
    %v496 = vand.u32 %v495, 4294901760
    %v497 = vsub.f32 %v495, %v496
    %v498 = vand.u32 %v497, 4294901760
    %499 = vmatmul.f32.gmra.mxu0 %v498
    %v500 = vpop.f32.mrf.mxu0
    %v501 = vadd.f32 %v90, %v500
    %v502 = vand.u32 %v166, 4294901760
    %v503 = vsub.f32 %v166, %v502
    %v504 = vand.u32 %v503, 4294901760
    %v505 = vsub.f32 %v503, %v504
    %v506 = vand.u32 %v505, 4294901760
    %507 = vmatmul.f32.gmra.mxu0 %v506
    %v508 = vpop.f32.mrf.mxu0
    %v509 = vadd.f32 %v90, %v508
    %v510 = vand.u32 %v169, 4294901760
    %v511 = vsub.f32 %v169, %v510
    %v512 = vand.u32 %v511, 4294901760
    %v513 = vsub.f32 %v511, %v512
    %v514 = vand.u32 %v513, 4294901760
    %515 = vmatmul.f32.gmra.mxu0 %v514
    %v516 = vpop.f32.mrf.mxu0
    %v517 = vadd.f32 %v90, %v516
    %v518 = vand.u32 %v172, 4294901760
    %v519 = vsub.f32 %v172, %v518
    %v520 = vand.u32 %v519, 4294901760
    %v521 = vsub.f32 %v519, %v520
    %v522 = vand.u32 %v521, 4294901760
    %523 = vmatmul.f32.gmra.mxu0 %v522
    %v524 = vpop.f32.mrf.mxu0
    %v525 = vadd.f32 %v90, %v524
    %v526 = vand.u32 %v175, 4294901760
    %v527 = vsub.f32 %v175, %v526
    %v528 = vand.u32 %v527, 4294901760
    %v529 = vsub.f32 %v527, %v528
    %v530 = vand.u32 %v529, 4294901760
    %531 = vmatmul.f32.gmra.mxu0 %v530
    %v532 = vpop.f32.mrf.mxu0
    %v533 = vadd.f32 %v90, %v532
    %v534 = vand.u32 %v178, 4294901760
    %v535 = vsub.f32 %v178, %v534
    %v536 = vand.u32 %v535, 4294901760
    %v537 = vsub.f32 %v535, %v536
    %v538 = vand.u32 %v537, 4294901760
    %539 = vmatmul.f32.gmra.mxu0 %v538
    %v540 = vpop.f32.mrf.mxu0
    %v541 = vadd.f32 %v90, %v540
    %v542 = vand.u32 %v181, 4294901760
    %v543 = vsub.f32 %v181, %v542
    %v544 = vand.u32 %v543, 4294901760
    %v545 = vsub.f32 %v543, %v544
    %v546 = vand.u32 %v545, 4294901760
    %547 = vmatmul.f32.gmra.mxu0 %v546
    %v548 = vpop.f32.mrf.mxu0
    %v549 = vadd.f32 %v90, %v548
    %v550 = vand.u32 %v184, 4294901760
    %v551 = vsub.f32 %v184, %v550
    %v552 = vand.u32 %v551, 4294901760
    %v553 = vsub.f32 %v551, %v552
    %v554 = vand.u32 %v553, 4294901760
    %555 = vmatmul.f32.gmra.mxu0 %v554
    %v556 = vpop.f32.mrf.mxu0
    %v557 = vadd.f32 %v90, %v556
    %v558 = vand.u32 %v187, 4294901760
    %v559 = vsub.f32 %v187, %v558
    %v560 = vand.u32 %v559, 4294901760
    %v561 = vsub.f32 %v559, %v560
    %v562 = vand.u32 %v561, 4294901760
    %563 = vmatmul.f32.gmra.mxu0 %v562
    %v564 = vpop.f32.mrf.mxu0
    %v565 = vadd.f32 %v90, %v564
    %v566 = vand.u32 %v190, 4294901760
    %v567 = vsub.f32 %v190, %v566
    %v568 = vand.u32 %v567, 4294901760
    %v569 = vsub.f32 %v567, %v568
    %v570 = vand.u32 %v569, 4294901760
    %571 = vmatmul.f32.gmra.mxu0 %v570
    %v572 = vpop.f32.mrf.mxu0
    %v573 = vadd.f32 %v90, %v572
    %v574 = vand.u32 %v193, 4294901760
    %v575 = vsub.f32 %v193, %v574
    %v576 = vand.u32 %v575, 4294901760
    %v577 = vsub.f32 %v575, %v576
    %v578 = vand.u32 %v577, 4294901760
    %579 = vmatmul.f32.gmra.mxu0 %v578
    %v580 = vpop.f32.mrf.mxu0
    %v581 = vadd.f32 %v90, %v580
    %v582 = vand.u32 %v196, 4294901760
    %v583 = vsub.f32 %v196, %v582
    %v584 = vand.u32 %v583, 4294901760
    %v585 = vsub.f32 %v583, %v584
    %v586 = vand.u32 %v585, 4294901760
    %587 = vmatmul.f32.gmra.mxu0 %v586
    %v588 = vpop.f32.mrf.mxu0
    %v589 = vadd.f32 %v90, %v588
    %v590 = vand.u32 %v199, 4294901760
    %v591 = vsub.f32 %v199, %v590
    %v592 = vand.u32 %v591, 4294901760
    %v593 = vsub.f32 %v591, %v592
    %v594 = vand.u32 %v593, 4294901760
    %595 = vmatmul.f32.gmra.mxu0 %v594
    %v596 = vpop.f32.mrf.mxu0
    %v597 = vadd.f32 %v90, %v596
    %v598 = vand.u32 %v202, 4294901760
    %v599 = vsub.f32 %v202, %v598
    %v600 = vand.u32 %v599, 4294901760
    %v601 = vsub.f32 %v599, %v600
    %v602 = vand.u32 %v601, 4294901760
    %603 = vmatmul.f32.gmra.mxu0 %v602
    %v604 = vpop.f32.mrf.mxu0
    %v605 = vadd.f32 %v90, %v604
    %v606 = vand.u32 %v205, 4294901760
    %v607 = vsub.f32 %v205, %v606
    %v608 = vand.u32 %v607, 4294901760
    %v609 = vsub.f32 %v607, %v608
    %v610 = vand.u32 %v609, 4294901760
    %611 = vmatmul.f32.gmra.mxu0 %v610
    %v612 = vpop.f32.mrf.mxu0
    %v613 = vadd.f32 %v90, %v612
    %v614 = vand.u32 %v208, 4294901760
    %v615 = vsub.f32 %v208, %v614
    %v616 = vand.u32 %v615, 4294901760
    %v617 = vsub.f32 %v615, %v616
    %v618 = vand.u32 %v617, 4294901760
    %619 = vmatmul.f32.gmra.mxu0 %v618
    %v620 = vpop.f32.mrf.mxu0
    %v621 = vadd.f32 %v90, %v620
    %v622 = vand.u32 %v211, 4294901760
    %v623 = vsub.f32 %v211, %v622
    %v624 = vand.u32 %v623, 4294901760
    %v625 = vsub.f32 %v623, %v624
    %v626 = vand.u32 %v625, 4294901760
    %627 = vmatmul.f32.gmra.mxu0 %v626
    %v628 = vpop.f32.mrf.mxu0
    %v629 = vadd.f32 %v90, %v628
    %v630 = vand.u32 %v214, 4294901760
    %v631 = vsub.f32 %v214, %v630
    %v632 = vand.u32 %v631, 4294901760
    %v633 = vsub.f32 %v631, %v632
    %v634 = vand.u32 %v633, 4294901760
    %635 = vmatmul.f32.gmra.mxu0 %v634
    %v636 = vpop.f32.mrf.mxu0
    %v637 = vadd.f32 %v90, %v636
    %v638 = vand.u32 %v217, 4294901760
    %v639 = vsub.f32 %v217, %v638
    %v640 = vand.u32 %v639, 4294901760
    %v641 = vsub.f32 %v639, %v640
    %v642 = vand.u32 %v641, 4294901760
    %643 = vmatmul.f32.gmra.mxu0 %v642
    %v644 = vpop.f32.mrf.mxu0
    %v645 = vadd.f32 %v90, %v644
    %v646 = vand.u32 %v220, 4294901760
    %v647 = vsub.f32 %v220, %v646
    %v648 = vand.u32 %v647, 4294901760
    %v649 = vsub.f32 %v647, %v648
    %v650 = vand.u32 %v649, 4294901760
    %651 = vmatmul.f32.gmra.mxu0 %v650
    %v652 = vpop.f32.mrf.mxu0
    %v653 = vadd.f32 %v90, %v652
    %v654 = vand.u32 %v223, 4294901760
    %v655 = vsub.f32 %v223, %v654
    %v656 = vand.u32 %v655, 4294901760
    %v657 = vsub.f32 %v655, %v656
    %v658 = vand.u32 %v657, 4294901760
    %659 = vmatmul.f32.gmra.mxu0 %v658
    %v660 = vpop.f32.mrf.mxu0
    %v661 = vadd.f32 %v90, %v660
    %v662 = vand.u32 %v226, 4294901760
    %v663 = vsub.f32 %v226, %v662
    %v664 = vand.u32 %v663, 4294901760
    %v665 = vsub.f32 %v663, %v664
    %v666 = vand.u32 %v665, 4294901760
    %667 = vmatmul.f32.gmra.mxu0 %v666
    %v668 = vpop.f32.mrf.mxu0
    %v669 = vadd.f32 %v90, %v668
    %v670 = vand.u32 %v229, 4294901760
    %v671 = vsub.f32 %v229, %v670
    %v672 = vand.u32 %v671, 4294901760
    %v673 = vsub.f32 %v671, %v672
    %v674 = vand.u32 %v673, 4294901760
    %675 = vmatmul.f32.gmra.mxu0 %v674
    %v676 = vpop.f32.mrf.mxu0
    %v677 = vadd.f32 %v90, %v676
    %v678 = vand.u32 %v232, 4294901760
    %v679 = vsub.f32 %v232, %v678
    %v680 = vand.u32 %v679, 4294901760
    %v681 = vsub.f32 %v679, %v680
    %v682 = vand.u32 %v681, 4294901760
    %683 = vmatmul.f32.gmra.mxu0 %v682
    %v684 = vpop.f32.mrf.mxu0
    %v685 = vadd.f32 %v90, %v684
    %v686 = vand.u32 %v235, 4294901760
    %v687 = vsub.f32 %v235, %v686
    %v688 = vand.u32 %v687, 4294901760
    %v689 = vsub.f32 %v687, %v688
    %v690 = vand.u32 %v689, 4294901760
    %691 = vmatmul.f32.gmra.mxu0 %v690
    %v692 = vpop.f32.mrf.mxu0
    %v693 = vadd.f32 %v90, %v692
    %v694 = vand.u32 %v238, 4294901760
    %v695 = vsub.f32 %v238, %v694
    %v696 = vand.u32 %v695, 4294901760
    %v697 = vsub.f32 %v695, %v696
    %v698 = vand.u32 %v697, 4294901760
    %699 = vmatmul.f32.gmra.mxu0 %v698
    %v700 = vpop.f32.mrf.mxu0
    %v701 = vadd.f32 %v90, %v700
    %v702 = vand.u32 %v241, 4294901760
    %v703 = vsub.f32 %v241, %v702
    %v704 = vand.u32 %v703, 4294901760
    %v705 = vsub.f32 %v703, %v704
    %v706 = vand.u32 %v705, 4294901760
    %707 = vmatmul.f32.gmra.mxu0 %v706
    %v708 = vpop.f32.mrf.mxu0
    %v709 = vadd.f32 %v90, %v708
    %v710 = vand.u32 %v244, 4294901760
    %v711 = vsub.f32 %v244, %v710
    %v712 = vand.u32 %v711, 4294901760
    %v713 = vsub.f32 %v711, %v712
    %v714 = vand.u32 %v713, 4294901760
    %715 = vmatmul.f32.gmra.mxu0 %v714
    %v716 = vpop.f32.mrf.mxu0
    %v717 = vadd.f32 %v90, %v716
    %v718 = vand.u32 %v247, 4294901760
    %v719 = vsub.f32 %v247, %v718
    %v720 = vand.u32 %v719, 4294901760
    %v721 = vsub.f32 %v719, %v720
    %v722 = vand.u32 %v721, 4294901760
    %723 = vmatmul.f32.gmra.mxu0 %v722
    %v724 = vpop.f32.mrf.mxu0
    %v725 = vadd.f32 %v90, %v724
    %v726 = vand.u32 %v250, 4294901760
    %v727 = vsub.f32 %v250, %v726
    %v728 = vand.u32 %v727, 4294901760
    %v729 = vsub.f32 %v727, %v728
    %v730 = vand.u32 %v729, 4294901760
    %731 = vmatmul.f32.gmra.mxu0 %v730
    %v732 = vpop.f32.mrf.mxu0
    %v733 = vadd.f32 %v90, %v732
    %v734 = vand.u32 %v253, 4294901760
    %v735 = vsub.f32 %v253, %v734
    %v736 = vand.u32 %v735, 4294901760
    %v737 = vsub.f32 %v735, %v736
    %v738 = vand.u32 %v737, 4294901760
    %739 = vmatmul.f32.gmra.mxu0 %v738
    %v740 = vpop.f32.mrf.mxu0
    %v741 = vadd.f32 %v90, %v740
    %v742 = vand.u32 %v256, 4294901760
    %v743 = vsub.f32 %v256, %v742
    %v744 = vand.u32 %v743, 4294901760
    %v745 = vsub.f32 %v743, %v744
    %v746 = vand.u32 %v745, 4294901760
    %747 = vmatmul.f32.gmra.mxu0 %v746
    %v748 = vpop.f32.mrf.mxu0
    %v749 = vadd.f32 %v90, %v748
    %v750 = vand.u32 %v259, 4294901760
    %v751 = vsub.f32 %v259, %v750
    %v752 = vand.u32 %v751, 4294901760
    %v753 = vsub.f32 %v751, %v752
    %v754 = vand.u32 %v753, 4294901760
    %755 = vmatmul.f32.gmra.mxu0 %v754
    %v756 = vpop.f32.mrf.mxu0
    %v757 = vadd.f32 %v90, %v756
    %v758 = vand.u32 %v262, 4294901760
    %v759 = vsub.f32 %v262, %v758
    %v760 = vand.u32 %v759, 4294901760
    %v761 = vsub.f32 %v759, %v760
    %v762 = vand.u32 %v761, 4294901760
    %763 = vmatmul.f32.gmra.mxu0 %v762
    %v764 = vpop.f32.mrf.mxu0
    %v765 = vadd.f32 %v90, %v764
    %v766 = vand.u32 %v265, 4294901760
    %v767 = vsub.f32 %v265, %v766
    %v768 = vand.u32 %v767, 4294901760
    %v769 = vsub.f32 %v767, %v768
    %v770 = vand.u32 %v769, 4294901760
    %771 = vmatmul.f32.gmra.mxu0 %v770
    %v772 = vpop.f32.mrf.mxu0
    %v773 = vadd.f32 %v90, %v772
    %v774 = vand.u32 %v268, 4294901760
    %v775 = vsub.f32 %v268, %v774
    %v776 = vand.u32 %v775, 4294901760
    %v777 = vsub.f32 %v775, %v776
    %v778 = vand.u32 %v777, 4294901760
    %779 = vmatmul.f32.gmra.mxu0 %v778
    %v780 = vpop.f32.mrf.mxu0
    %v781 = vadd.f32 %v90, %v780
    %v782 = vand.u32 %v271, 4294901760
    %v783 = vsub.f32 %v271, %v782
    %v784 = vand.u32 %v783, 4294901760
    %v785 = vsub.f32 %v783, %v784
    %v786 = vand.u32 %v785, 4294901760
    %787 = vmatmul.f32.gmra.mxu0 %v786
    %v788 = vpop.f32.mrf.mxu0
    %v789 = vadd.f32 %v90, %v788
    %v790 = vand.u32 %v274, 4294901760
    %v791 = vsub.f32 %v274, %v790
    %v792 = vand.u32 %v791, 4294901760
    %v793 = vsub.f32 %v791, %v792
    %v794 = vand.u32 %v793, 4294901760
    %795 = vmatmul.f32.gmra.mxu0 %v794
    %v796 = vpop.f32.mrf.mxu0
    %v797 = vadd.f32 %v90, %v796
    %v798 = vand.u32 %v277, 4294901760
    %v799 = vsub.f32 %v277, %v798
    %v800 = vand.u32 %v799, 4294901760
    %v801 = vsub.f32 %v799, %v800
    %v802 = vand.u32 %v801, 4294901760
    %803 = vmatmul.f32.gmra.mxu0 %v802
    %v804 = vpop.f32.mrf.mxu0
    %v805 = vadd.f32 %v90, %v804
    %v806 = vand.u32 %v280, 4294901760
    %v807 = vsub.f32 %v280, %v806
    %v808 = vand.u32 %v807, 4294901760
    %v809 = vsub.f32 %v807, %v808
    %v810 = vand.u32 %v809, 4294901760
    %811 = vmatmul.f32.gmra.mxu0 %v810
    %v812 = vpop.f32.mrf.mxu0
    %v813 = vadd.f32 %v90, %v812
    %v814 = vand.u32 %v283, 4294901760
    %v815 = vsub.f32 %v283, %v814
    %v816 = vand.u32 %v815, 4294901760
    %v817 = vsub.f32 %v815, %v816
    %v818 = vand.u32 %v817, 4294901760
    %819 = vmatmul.f32.gmra.mxu0 %v818
    %v820 = vpop.f32.mrf.mxu0
    %v821 = vadd.f32 %v90, %v820
    %822 = vdwg.mxu0
    %823 = vmatpush.msra.mxu0 0.0
    %824 = vmatpush.msra.mxu0 0.0
    %825 = vmatpush.msra.mxu0 0.0
    %826 = vmatpush.msra.mxu0 0.0
    %827 = vmatpush.msra.mxu0 0.0
    %828 = vmatpush.msra.mxu0 0.0
    %829 = vmatpush.msra.mxu0 0.0
    %v830 = vand.u32 %v87, 4294901760
    %v831 = vsub.f32 %v87, %v830
    %v832 = vand.u32 %v831, 4294901760
    %v833 = vsub.f32 %v831, %v832
    %v834 = vand.u32 %v833, 4294901760
    %835 = vmatpush.msra.mxu0 %v834
    %v836 = vand.u32 %v86, 4294901760
    %v837 = vsub.f32 %v86, %v836
    %v838 = vand.u32 %v837, 4294901760
    %v839 = vsub.f32 %v837, %v838
    %v840 = vand.u32 %v839, 4294901760
    %841 = vmatpush.msra.mxu0 %v840
    %v842 = vand.u32 %v85, 4294901760
    %v843 = vsub.f32 %v85, %v842
    %v844 = vand.u32 %v843, 4294901760
    %v845 = vsub.f32 %v843, %v844
    %v846 = vand.u32 %v845, 4294901760
    %847 = vmatpush.msra.mxu0 %v846
    %v848 = vand.u32 %v84, 4294901760
    %v849 = vsub.f32 %v84, %v848
    %v850 = vand.u32 %v849, 4294901760
    %v851 = vsub.f32 %v849, %v850
    %v852 = vand.u32 %v851, 4294901760
    %853 = vmatpush.msra.mxu0 %v852
    %v854 = vand.u32 %v83, 4294901760
    %v855 = vsub.f32 %v83, %v854
    %v856 = vand.u32 %v855, 4294901760
    %v857 = vsub.f32 %v855, %v856
    %v858 = vand.u32 %v857, 4294901760
    %859 = vmatpush.msra.mxu0 %v858
    %v860 = vand.u32 %v82, 4294901760
    %v861 = vsub.f32 %v82, %v860
    %v862 = vand.u32 %v861, 4294901760
    %v863 = vsub.f32 %v861, %v862
    %v864 = vand.u32 %v863, 4294901760
    %865 = vmatpush.msra.mxu0 %v864
    %v866 = vand.u32 %v81, 4294901760
    %v867 = vsub.f32 %v81, %v866
    %v868 = vand.u32 %v867, 4294901760
    %v869 = vsub.f32 %v867, %v868
    %v870 = vand.u32 %v869, 4294901760
    %871 = vmatpush.msra.mxu0 %v870
    %v872 = vand.u32 %v80, 4294901760
    %v873 = vsub.f32 %v80, %v872
    %v874 = vand.u32 %v873, 4294901760
    %v875 = vsub.f32 %v873, %v874
    %v876 = vand.u32 %v875, 4294901760
    %877 = vmatpush.msra.mxu0 %v876
    %v878 = vand.u32 %v79, 4294901760
    %v879 = vsub.f32 %v79, %v878
    %v880 = vand.u32 %v879, 4294901760
    %v881 = vsub.f32 %v879, %v880
    %v882 = vand.u32 %v881, 4294901760
    %883 = vmatpush.msra.mxu0 %v882
    %v884 = vand.u32 %v94, 4294901760
    %885 = vmatmul.f32.gmra.mxu0 %v884
    %v886 = vpop.f32.mrf.mxu0
    %v887 = vadd.f32 %v317, %v886
    %v888 = vand.u32 %v97, 4294901760
    %889 = vmatmul.f32.gmra.mxu0 %v888
    %v890 = vpop.f32.mrf.mxu0
    %v891 = vadd.f32 %v325, %v890
    %v892 = vand.u32 %v100, 4294901760
    %893 = vmatmul.f32.gmra.mxu0 %v892
    %v894 = vpop.f32.mrf.mxu0
    %v895 = vadd.f32 %v333, %v894
    %v896 = vand.u32 %v103, 4294901760
    %897 = vmatmul.f32.gmra.mxu0 %v896
    %v898 = vpop.f32.mrf.mxu0
    %v899 = vadd.f32 %v341, %v898
    %v900 = vand.u32 %v106, 4294901760
    %901 = vmatmul.f32.gmra.mxu0 %v900
    %v902 = vpop.f32.mrf.mxu0
    %v903 = vadd.f32 %v349, %v902
    %v904 = vand.u32 %v109, 4294901760
    %905 = vmatmul.f32.gmra.mxu0 %v904
    %v906 = vpop.f32.mrf.mxu0
    %v907 = vadd.f32 %v357, %v906
    %v908 = vand.u32 %v112, 4294901760
    %909 = vmatmul.f32.gmra.mxu0 %v908
    %v910 = vpop.f32.mrf.mxu0
    %v911 = vadd.f32 %v365, %v910
    %v912 = vand.u32 %v115, 4294901760
    %913 = vmatmul.f32.gmra.mxu0 %v912
    %v914 = vpop.f32.mrf.mxu0
    %v915 = vadd.f32 %v373, %v914
    %v916 = vand.u32 %v118, 4294901760
    %917 = vmatmul.f32.gmra.mxu0 %v916
    %v918 = vpop.f32.mrf.mxu0
    %v919 = vadd.f32 %v381, %v918
    %v920 = vand.u32 %v121, 4294901760
    %921 = vmatmul.f32.gmra.mxu0 %v920
    %v922 = vpop.f32.mrf.mxu0
    %v923 = vadd.f32 %v389, %v922
    %v924 = vand.u32 %v124, 4294901760
    %925 = vmatmul.f32.gmra.mxu0 %v924
    %v926 = vpop.f32.mrf.mxu0
    %v927 = vadd.f32 %v397, %v926
    %v928 = vand.u32 %v127, 4294901760
    %929 = vmatmul.f32.gmra.mxu0 %v928
    %v930 = vpop.f32.mrf.mxu0
    %v931 = vadd.f32 %v405, %v930
    %v932 = vand.u32 %v130, 4294901760
    %933 = vmatmul.f32.gmra.mxu0 %v932
    %v934 = vpop.f32.mrf.mxu0
    %v935 = vadd.f32 %v413, %v934
    %v936 = vand.u32 %v133, 4294901760
    %937 = vmatmul.f32.gmra.mxu0 %v936
    %v938 = vpop.f32.mrf.mxu0
    %v939 = vadd.f32 %v421, %v938
    %v940 = vand.u32 %v136, 4294901760
    %941 = vmatmul.f32.gmra.mxu0 %v940
    %v942 = vpop.f32.mrf.mxu0
    %v943 = vadd.f32 %v429, %v942
    %v944 = vand.u32 %v139, 4294901760
    %945 = vmatmul.f32.gmra.mxu0 %v944
    %v946 = vpop.f32.mrf.mxu0
    %v947 = vadd.f32 %v437, %v946
    %v948 = vand.u32 %v142, 4294901760
    %949 = vmatmul.f32.gmra.mxu0 %v948
    %v950 = vpop.f32.mrf.mxu0
    %v951 = vadd.f32 %v445, %v950
    %v952 = vand.u32 %v145, 4294901760
    %953 = vmatmul.f32.gmra.mxu0 %v952
    %v954 = vpop.f32.mrf.mxu0
    %v955 = vadd.f32 %v453, %v954
    %v956 = vand.u32 %v148, 4294901760
    %957 = vmatmul.f32.gmra.mxu0 %v956
    %v958 = vpop.f32.mrf.mxu0
    %v959 = vadd.f32 %v461, %v958
    %v960 = vand.u32 %v151, 4294901760
    %961 = vmatmul.f32.gmra.mxu0 %v960
    %v962 = vpop.f32.mrf.mxu0
    %v963 = vadd.f32 %v469, %v962
    %v964 = vand.u32 %v154, 4294901760
    %965 = vmatmul.f32.gmra.mxu0 %v964
    %v966 = vpop.f32.mrf.mxu0
    %v967 = vadd.f32 %v477, %v966
    %v968 = vand.u32 %v157, 4294901760
    %969 = vmatmul.f32.gmra.mxu0 %v968
    %v970 = vpop.f32.mrf.mxu0
    %v971 = vadd.f32 %v485, %v970
    %v972 = vand.u32 %v160, 4294901760
    %973 = vmatmul.f32.gmra.mxu0 %v972
    %v974 = vpop.f32.mrf.mxu0
    %v975 = vadd.f32 %v493, %v974
    %v976 = vand.u32 %v163, 4294901760
    %977 = vmatmul.f32.gmra.mxu0 %v976
    %v978 = vpop.f32.mrf.mxu0
    %v979 = vadd.f32 %v501, %v978
    %v980 = vand.u32 %v166, 4294901760
    %981 = vmatmul.f32.gmra.mxu0 %v980
    %v982 = vpop.f32.mrf.mxu0
    %v983 = vadd.f32 %v509, %v982
    %v984 = vand.u32 %v169, 4294901760
    %985 = vmatmul.f32.gmra.mxu0 %v984
    %v986 = vpop.f32.mrf.mxu0
    %v987 = vadd.f32 %v517, %v986
    %v988 = vand.u32 %v172, 4294901760
    %989 = vmatmul.f32.gmra.mxu0 %v988
    %v990 = vpop.f32.mrf.mxu0
    %v991 = vadd.f32 %v525, %v990
    %v992 = vand.u32 %v175, 4294901760
    %993 = vmatmul.f32.gmra.mxu0 %v992
    %v994 = vpop.f32.mrf.mxu0
    %v995 = vadd.f32 %v533, %v994
    %v996 = vand.u32 %v178, 4294901760
    %997 = vmatmul.f32.gmra.mxu0 %v996
    %v998 = vpop.f32.mrf.mxu0
    %v999 = vadd.f32 %v541, %v998
    %v1000 = vand.u32 %v181, 4294901760
    %1001 = vmatmul.f32.gmra.mxu0 %v1000
    %v1002 = vpop.f32.mrf.mxu0
    %v1003 = vadd.f32 %v549, %v1002
    %v1004 = vand.u32 %v184, 4294901760
    %1005 = vmatmul.f32.gmra.mxu0 %v1004
    %v1006 = vpop.f32.mrf.mxu0
    %v1007 = vadd.f32 %v557, %v1006
    %v1008 = vand.u32 %v187, 4294901760
    %1009 = vmatmul.f32.gmra.mxu0 %v1008
    %v1010 = vpop.f32.mrf.mxu0
    %v1011 = vadd.f32 %v565, %v1010
    %v1012 = vand.u32 %v190, 4294901760
    %1013 = vmatmul.f32.gmra.mxu0 %v1012
    %v1014 = vpop.f32.mrf.mxu0
    %v1015 = vadd.f32 %v573, %v1014
    %v1016 = vand.u32 %v193, 4294901760
    %1017 = vmatmul.f32.gmra.mxu0 %v1016
    %v1018 = vpop.f32.mrf.mxu0
    %v1019 = vadd.f32 %v581, %v1018
    %v1020 = vand.u32 %v196, 4294901760
    %1021 = vmatmul.f32.gmra.mxu0 %v1020
    %v1022 = vpop.f32.mrf.mxu0
    %v1023 = vadd.f32 %v589, %v1022
    %v1024 = vand.u32 %v199, 4294901760
    %1025 = vmatmul.f32.gmra.mxu0 %v1024
    %v1026 = vpop.f32.mrf.mxu0
    %v1027 = vadd.f32 %v597, %v1026
    %v1028 = vand.u32 %v202, 4294901760
    %1029 = vmatmul.f32.gmra.mxu0 %v1028
    %v1030 = vpop.f32.mrf.mxu0
    %v1031 = vadd.f32 %v605, %v1030
    %v1032 = vand.u32 %v205, 4294901760
    %1033 = vmatmul.f32.gmra.mxu0 %v1032
    %v1034 = vpop.f32.mrf.mxu0
    %v1035 = vadd.f32 %v613, %v1034
    %v1036 = vand.u32 %v208, 4294901760
    %1037 = vmatmul.f32.gmra.mxu0 %v1036
    %v1038 = vpop.f32.mrf.mxu0
    %v1039 = vadd.f32 %v621, %v1038
    %v1040 = vand.u32 %v211, 4294901760
    %1041 = vmatmul.f32.gmra.mxu0 %v1040
    %v1042 = vpop.f32.mrf.mxu0
    %v1043 = vadd.f32 %v629, %v1042
    %v1044 = vand.u32 %v214, 4294901760
    %1045 = vmatmul.f32.gmra.mxu0 %v1044
    %v1046 = vpop.f32.mrf.mxu0
    %v1047 = vadd.f32 %v637, %v1046
    %v1048 = vand.u32 %v217, 4294901760
    %1049 = vmatmul.f32.gmra.mxu0 %v1048
    %v1050 = vpop.f32.mrf.mxu0
    %v1051 = vadd.f32 %v645, %v1050
    %v1052 = vand.u32 %v220, 4294901760
    %1053 = vmatmul.f32.gmra.mxu0 %v1052
    %v1054 = vpop.f32.mrf.mxu0
    %v1055 = vadd.f32 %v653, %v1054
    %v1056 = vand.u32 %v223, 4294901760
    %1057 = vmatmul.f32.gmra.mxu0 %v1056
    %v1058 = vpop.f32.mrf.mxu0
    %v1059 = vadd.f32 %v661, %v1058
    %v1060 = vand.u32 %v226, 4294901760
    %1061 = vmatmul.f32.gmra.mxu0 %v1060
    %v1062 = vpop.f32.mrf.mxu0
    %v1063 = vadd.f32 %v669, %v1062
    %v1064 = vand.u32 %v229, 4294901760
    %1065 = vmatmul.f32.gmra.mxu0 %v1064
    %v1066 = vpop.f32.mrf.mxu0
    %v1067 = vadd.f32 %v677, %v1066
    %v1068 = vand.u32 %v232, 4294901760
    %1069 = vmatmul.f32.gmra.mxu0 %v1068
    %v1070 = vpop.f32.mrf.mxu0
    %v1071 = vadd.f32 %v685, %v1070
    %v1072 = vand.u32 %v235, 4294901760
    %1073 = vmatmul.f32.gmra.mxu0 %v1072
    %v1074 = vpop.f32.mrf.mxu0
    %v1075 = vadd.f32 %v693, %v1074
    %v1076 = vand.u32 %v238, 4294901760
    %1077 = vmatmul.f32.gmra.mxu0 %v1076
    %v1078 = vpop.f32.mrf.mxu0
    %v1079 = vadd.f32 %v701, %v1078
    %v1080 = vand.u32 %v241, 4294901760
    %1081 = vmatmul.f32.gmra.mxu0 %v1080
    %v1082 = vpop.f32.mrf.mxu0
    %v1083 = vadd.f32 %v709, %v1082
    %v1084 = vand.u32 %v244, 4294901760
    %1085 = vmatmul.f32.gmra.mxu0 %v1084
    %v1086 = vpop.f32.mrf.mxu0
    %v1087 = vadd.f32 %v717, %v1086
    %v1088 = vand.u32 %v247, 4294901760
    %1089 = vmatmul.f32.gmra.mxu0 %v1088
    %v1090 = vpop.f32.mrf.mxu0
    %v1091 = vadd.f32 %v725, %v1090
    %v1092 = vand.u32 %v250, 4294901760
    %1093 = vmatmul.f32.gmra.mxu0 %v1092
    %v1094 = vpop.f32.mrf.mxu0
    %v1095 = vadd.f32 %v733, %v1094
    %v1096 = vand.u32 %v253, 4294901760
    %1097 = vmatmul.f32.gmra.mxu0 %v1096
    %v1098 = vpop.f32.mrf.mxu0
    %v1099 = vadd.f32 %v741, %v1098
    %v1100 = vand.u32 %v256, 4294901760
    %1101 = vmatmul.f32.gmra.mxu0 %v1100
    %v1102 = vpop.f32.mrf.mxu0
    %v1103 = vadd.f32 %v749, %v1102
    %v1104 = vand.u32 %v259, 4294901760
    %1105 = vmatmul.f32.gmra.mxu0 %v1104
    %v1106 = vpop.f32.mrf.mxu0
    %v1107 = vadd.f32 %v757, %v1106
    %v1108 = vand.u32 %v262, 4294901760
    %1109 = vmatmul.f32.gmra.mxu0 %v1108
    %v1110 = vpop.f32.mrf.mxu0
    %v1111 = vadd.f32 %v765, %v1110
    %v1112 = vand.u32 %v265, 4294901760
    %1113 = vmatmul.f32.gmra.mxu0 %v1112
    %v1114 = vpop.f32.mrf.mxu0
    %v1115 = vadd.f32 %v773, %v1114
    %v1116 = vand.u32 %v268, 4294901760
    %1117 = vmatmul.f32.gmra.mxu0 %v1116
    %v1118 = vpop.f32.mrf.mxu0
    %v1119 = vadd.f32 %v781, %v1118
    %v1120 = vand.u32 %v271, 4294901760
    %1121 = vmatmul.f32.gmra.mxu0 %v1120
    %v1122 = vpop.f32.mrf.mxu0
    %v1123 = vadd.f32 %v789, %v1122
    %v1124 = vand.u32 %v274, 4294901760
    %1125 = vmatmul.f32.gmra.mxu0 %v1124
    %v1126 = vpop.f32.mrf.mxu0
    %v1127 = vadd.f32 %v797, %v1126
    %v1128 = vand.u32 %v277, 4294901760
    %1129 = vmatmul.f32.gmra.mxu0 %v1128
    %v1130 = vpop.f32.mrf.mxu0
    %v1131 = vadd.f32 %v805, %v1130
    %v1132 = vand.u32 %v280, 4294901760
    %1133 = vmatmul.f32.gmra.mxu0 %v1132
    %v1134 = vpop.f32.mrf.mxu0
    %v1135 = vadd.f32 %v813, %v1134
    %v1136 = vand.u32 %v283, 4294901760
    %1137 = vmatmul.f32.gmra.mxu0 %v1136
    %v1138 = vpop.f32.mrf.mxu0
    %v1139 = vadd.f32 %v821, %v1138
    %1140 = vdwg.mxu0
    %1141 = vmatpush.msra.mxu0 0.0
    %1142 = vmatpush.msra.mxu0 0.0
    %1143 = vmatpush.msra.mxu0 0.0
    %1144 = vmatpush.msra.mxu0 0.0
    %1145 = vmatpush.msra.mxu0 0.0
    %1146 = vmatpush.msra.mxu0 0.0
    %1147 = vmatpush.msra.mxu0 0.0
    %v1148 = vand.u32 %v87, 4294901760
    %v1149 = vsub.f32 %v87, %v1148
    %1150 = vmatpush.msra.mxu0 %v1149
    %v1151 = vand.u32 %v86, 4294901760
    %v1152 = vsub.f32 %v86, %v1151
    %1153 = vmatpush.msra.mxu0 %v1152
    %v1154 = vand.u32 %v85, 4294901760
    %v1155 = vsub.f32 %v85, %v1154
    %1156 = vmatpush.msra.mxu0 %v1155
    %v1157 = vand.u32 %v84, 4294901760
    %v1158 = vsub.f32 %v84, %v1157
    %1159 = vmatpush.msra.mxu0 %v1158
    %v1160 = vand.u32 %v83, 4294901760
    %v1161 = vsub.f32 %v83, %v1160
    %1162 = vmatpush.msra.mxu0 %v1161
    %v1163 = vand.u32 %v82, 4294901760
    %v1164 = vsub.f32 %v82, %v1163
    %1165 = vmatpush.msra.mxu0 %v1164
    %v1166 = vand.u32 %v81, 4294901760
    %v1167 = vsub.f32 %v81, %v1166
    %1168 = vmatpush.msra.mxu0 %v1167
    %v1169 = vand.u32 %v80, 4294901760
    %v1170 = vsub.f32 %v80, %v1169
    %1171 = vmatpush.msra.mxu0 %v1170
    %v1172 = vand.u32 %v79, 4294901760
    %v1173 = vsub.f32 %v79, %v1172
    %1174 = vmatpush.msra.mxu0 %v1173
    %v1175 = vand.u32 %v94, 4294901760
    %v1176 = vsub.f32 %v94, %v1175
    %1177 = vmatmul.f32.gmra.mxu0 %v1176
    %v1178 = vpop.f32.mrf.mxu0
    %v1179 = vadd.f32 %v887, %v1178
    %v1180 = vand.u32 %v97, 4294901760
    %v1181 = vsub.f32 %v97, %v1180
    %1182 = vmatmul.f32.gmra.mxu0 %v1181
    %v1183 = vpop.f32.mrf.mxu0
    %v1184 = vadd.f32 %v891, %v1183
    %v1185 = vand.u32 %v100, 4294901760
    %v1186 = vsub.f32 %v100, %v1185
    %1187 = vmatmul.f32.gmra.mxu0 %v1186
    %v1188 = vpop.f32.mrf.mxu0
    %v1189 = vadd.f32 %v895, %v1188
    %v1190 = vand.u32 %v103, 4294901760
    %v1191 = vsub.f32 %v103, %v1190
    %1192 = vmatmul.f32.gmra.mxu0 %v1191
    %v1193 = vpop.f32.mrf.mxu0
    %v1194 = vadd.f32 %v899, %v1193
    %v1195 = vand.u32 %v106, 4294901760
    %v1196 = vsub.f32 %v106, %v1195
    %1197 = vmatmul.f32.gmra.mxu0 %v1196
    %v1198 = vpop.f32.mrf.mxu0
    %v1199 = vadd.f32 %v903, %v1198
    %v1200 = vand.u32 %v109, 4294901760
    %v1201 = vsub.f32 %v109, %v1200
    %1202 = vmatmul.f32.gmra.mxu0 %v1201
    %v1203 = vpop.f32.mrf.mxu0
    %v1204 = vadd.f32 %v907, %v1203
    %v1205 = vand.u32 %v112, 4294901760
    %v1206 = vsub.f32 %v112, %v1205
    %1207 = vmatmul.f32.gmra.mxu0 %v1206
    %v1208 = vpop.f32.mrf.mxu0
    %v1209 = vadd.f32 %v911, %v1208
    %v1210 = vand.u32 %v115, 4294901760
    %v1211 = vsub.f32 %v115, %v1210
    %1212 = vmatmul.f32.gmra.mxu0 %v1211
    %v1213 = vpop.f32.mrf.mxu0
    %v1214 = vadd.f32 %v915, %v1213
    %v1215 = vand.u32 %v118, 4294901760
    %v1216 = vsub.f32 %v118, %v1215
    %1217 = vmatmul.f32.gmra.mxu0 %v1216
    %v1218 = vpop.f32.mrf.mxu0
    %v1219 = vadd.f32 %v919, %v1218
    %v1220 = vand.u32 %v121, 4294901760
    %v1221 = vsub.f32 %v121, %v1220
    %1222 = vmatmul.f32.gmra.mxu0 %v1221
    %v1223 = vpop.f32.mrf.mxu0
    %v1224 = vadd.f32 %v923, %v1223
    %v1225 = vand.u32 %v124, 4294901760
    %v1226 = vsub.f32 %v124, %v1225
    %1227 = vmatmul.f32.gmra.mxu0 %v1226
    %v1228 = vpop.f32.mrf.mxu0
    %v1229 = vadd.f32 %v927, %v1228
    %v1230 = vand.u32 %v127, 4294901760
    %v1231 = vsub.f32 %v127, %v1230
    %1232 = vmatmul.f32.gmra.mxu0 %v1231
    %v1233 = vpop.f32.mrf.mxu0
    %v1234 = vadd.f32 %v931, %v1233
    %v1235 = vand.u32 %v130, 4294901760
    %v1236 = vsub.f32 %v130, %v1235
    %1237 = vmatmul.f32.gmra.mxu0 %v1236
    %v1238 = vpop.f32.mrf.mxu0
    %v1239 = vadd.f32 %v935, %v1238
    %v1240 = vand.u32 %v133, 4294901760
    %v1241 = vsub.f32 %v133, %v1240
    %1242 = vmatmul.f32.gmra.mxu0 %v1241
    %v1243 = vpop.f32.mrf.mxu0
    %v1244 = vadd.f32 %v939, %v1243
    %v1245 = vand.u32 %v136, 4294901760
    %v1246 = vsub.f32 %v136, %v1245
    %1247 = vmatmul.f32.gmra.mxu0 %v1246
    %v1248 = vpop.f32.mrf.mxu0
    %v1249 = vadd.f32 %v943, %v1248
    %v1250 = vand.u32 %v139, 4294901760
    %v1251 = vsub.f32 %v139, %v1250
    %1252 = vmatmul.f32.gmra.mxu0 %v1251
    %v1253 = vpop.f32.mrf.mxu0
    %v1254 = vadd.f32 %v947, %v1253
    %v1255 = vand.u32 %v142, 4294901760
    %v1256 = vsub.f32 %v142, %v1255
    %1257 = vmatmul.f32.gmra.mxu0 %v1256
    %v1258 = vpop.f32.mrf.mxu0
    %v1259 = vadd.f32 %v951, %v1258
    %v1260 = vand.u32 %v145, 4294901760
    %v1261 = vsub.f32 %v145, %v1260
    %1262 = vmatmul.f32.gmra.mxu0 %v1261
    %v1263 = vpop.f32.mrf.mxu0
    %v1264 = vadd.f32 %v955, %v1263
    %v1265 = vand.u32 %v148, 4294901760
    %v1266 = vsub.f32 %v148, %v1265
    %1267 = vmatmul.f32.gmra.mxu0 %v1266
    %v1268 = vpop.f32.mrf.mxu0
    %v1269 = vadd.f32 %v959, %v1268
    %v1270 = vand.u32 %v151, 4294901760
    %v1271 = vsub.f32 %v151, %v1270
    %1272 = vmatmul.f32.gmra.mxu0 %v1271
    %v1273 = vpop.f32.mrf.mxu0
    %v1274 = vadd.f32 %v963, %v1273
    %v1275 = vand.u32 %v154, 4294901760
    %v1276 = vsub.f32 %v154, %v1275
    %1277 = vmatmul.f32.gmra.mxu0 %v1276
    %v1278 = vpop.f32.mrf.mxu0
    %v1279 = vadd.f32 %v967, %v1278
    %v1280 = vand.u32 %v157, 4294901760
    %v1281 = vsub.f32 %v157, %v1280
    %1282 = vmatmul.f32.gmra.mxu0 %v1281
    %v1283 = vpop.f32.mrf.mxu0
    %v1284 = vadd.f32 %v971, %v1283
    %v1285 = vand.u32 %v160, 4294901760
    %v1286 = vsub.f32 %v160, %v1285
    %1287 = vmatmul.f32.gmra.mxu0 %v1286
    %v1288 = vpop.f32.mrf.mxu0
    %v1289 = vadd.f32 %v975, %v1288
    %v1290 = vand.u32 %v163, 4294901760
    %v1291 = vsub.f32 %v163, %v1290
    %1292 = vmatmul.f32.gmra.mxu0 %v1291
    %v1293 = vpop.f32.mrf.mxu0
    %v1294 = vadd.f32 %v979, %v1293
    %v1295 = vand.u32 %v166, 4294901760
    %v1296 = vsub.f32 %v166, %v1295
    %1297 = vmatmul.f32.gmra.mxu0 %v1296
    %v1298 = vpop.f32.mrf.mxu0
    %v1299 = vadd.f32 %v983, %v1298
    %v1300 = vand.u32 %v169, 4294901760
    %v1301 = vsub.f32 %v169, %v1300
    %1302 = vmatmul.f32.gmra.mxu0 %v1301
    %v1303 = vpop.f32.mrf.mxu0
    %v1304 = vadd.f32 %v987, %v1303
    %v1305 = vand.u32 %v172, 4294901760
    %v1306 = vsub.f32 %v172, %v1305
    %1307 = vmatmul.f32.gmra.mxu0 %v1306
    %v1308 = vpop.f32.mrf.mxu0
    %v1309 = vadd.f32 %v991, %v1308
    %v1310 = vand.u32 %v175, 4294901760
    %v1311 = vsub.f32 %v175, %v1310
    %1312 = vmatmul.f32.gmra.mxu0 %v1311
    %v1313 = vpop.f32.mrf.mxu0
    %v1314 = vadd.f32 %v995, %v1313
    %v1315 = vand.u32 %v178, 4294901760
    %v1316 = vsub.f32 %v178, %v1315
    %1317 = vmatmul.f32.gmra.mxu0 %v1316
    %v1318 = vpop.f32.mrf.mxu0
    %v1319 = vadd.f32 %v999, %v1318
    %v1320 = vand.u32 %v181, 4294901760
    %v1321 = vsub.f32 %v181, %v1320
    %1322 = vmatmul.f32.gmra.mxu0 %v1321
    %v1323 = vpop.f32.mrf.mxu0
    %v1324 = vadd.f32 %v1003, %v1323
    %v1325 = vand.u32 %v184, 4294901760
    %v1326 = vsub.f32 %v184, %v1325
    %1327 = vmatmul.f32.gmra.mxu0 %v1326
    %v1328 = vpop.f32.mrf.mxu0
    %v1329 = vadd.f32 %v1007, %v1328
    %v1330 = vand.u32 %v187, 4294901760
    %v1331 = vsub.f32 %v187, %v1330
    %1332 = vmatmul.f32.gmra.mxu0 %v1331
    %v1333 = vpop.f32.mrf.mxu0
    %v1334 = vadd.f32 %v1011, %v1333
    %v1335 = vand.u32 %v190, 4294901760
    %v1336 = vsub.f32 %v190, %v1335
    %1337 = vmatmul.f32.gmra.mxu0 %v1336
    %v1338 = vpop.f32.mrf.mxu0
    %v1339 = vadd.f32 %v1015, %v1338
    %v1340 = vand.u32 %v193, 4294901760
    %v1341 = vsub.f32 %v193, %v1340
    %1342 = vmatmul.f32.gmra.mxu0 %v1341
    %v1343 = vpop.f32.mrf.mxu0
    %v1344 = vadd.f32 %v1019, %v1343
    %v1345 = vand.u32 %v196, 4294901760
    %v1346 = vsub.f32 %v196, %v1345
    %1347 = vmatmul.f32.gmra.mxu0 %v1346
    %v1348 = vpop.f32.mrf.mxu0
    %v1349 = vadd.f32 %v1023, %v1348
    %v1350 = vand.u32 %v199, 4294901760
    %v1351 = vsub.f32 %v199, %v1350
    %1352 = vmatmul.f32.gmra.mxu0 %v1351
    %v1353 = vpop.f32.mrf.mxu0
    %v1354 = vadd.f32 %v1027, %v1353
    %v1355 = vand.u32 %v202, 4294901760
    %v1356 = vsub.f32 %v202, %v1355
    %1357 = vmatmul.f32.gmra.mxu0 %v1356
    %v1358 = vpop.f32.mrf.mxu0
    %v1359 = vadd.f32 %v1031, %v1358
    %v1360 = vand.u32 %v205, 4294901760
    %v1361 = vsub.f32 %v205, %v1360
    %1362 = vmatmul.f32.gmra.mxu0 %v1361
    %v1363 = vpop.f32.mrf.mxu0
    %v1364 = vadd.f32 %v1035, %v1363
    %v1365 = vand.u32 %v208, 4294901760
    %v1366 = vsub.f32 %v208, %v1365
    %1367 = vmatmul.f32.gmra.mxu0 %v1366
    %v1368 = vpop.f32.mrf.mxu0
    %v1369 = vadd.f32 %v1039, %v1368
    %v1370 = vand.u32 %v211, 4294901760
    %v1371 = vsub.f32 %v211, %v1370
    %1372 = vmatmul.f32.gmra.mxu0 %v1371
    %v1373 = vpop.f32.mrf.mxu0
    %v1374 = vadd.f32 %v1043, %v1373
    %v1375 = vand.u32 %v214, 4294901760
    %v1376 = vsub.f32 %v214, %v1375
    %1377 = vmatmul.f32.gmra.mxu0 %v1376
    %v1378 = vpop.f32.mrf.mxu0
    %v1379 = vadd.f32 %v1047, %v1378
    %v1380 = vand.u32 %v217, 4294901760
    %v1381 = vsub.f32 %v217, %v1380
    %1382 = vmatmul.f32.gmra.mxu0 %v1381
    %v1383 = vpop.f32.mrf.mxu0
    %v1384 = vadd.f32 %v1051, %v1383
    %v1385 = vand.u32 %v220, 4294901760
    %v1386 = vsub.f32 %v220, %v1385
    %1387 = vmatmul.f32.gmra.mxu0 %v1386
    %v1388 = vpop.f32.mrf.mxu0
    %v1389 = vadd.f32 %v1055, %v1388
    %v1390 = vand.u32 %v223, 4294901760
    %v1391 = vsub.f32 %v223, %v1390
    %1392 = vmatmul.f32.gmra.mxu0 %v1391
    %v1393 = vpop.f32.mrf.mxu0
    %v1394 = vadd.f32 %v1059, %v1393
    %v1395 = vand.u32 %v226, 4294901760
    %v1396 = vsub.f32 %v226, %v1395
    %1397 = vmatmul.f32.gmra.mxu0 %v1396
    %v1398 = vpop.f32.mrf.mxu0
    %v1399 = vadd.f32 %v1063, %v1398
    %v1400 = vand.u32 %v229, 4294901760
    %v1401 = vsub.f32 %v229, %v1400
    %1402 = vmatmul.f32.gmra.mxu0 %v1401
    %v1403 = vpop.f32.mrf.mxu0
    %v1404 = vadd.f32 %v1067, %v1403
    %v1405 = vand.u32 %v232, 4294901760
    %v1406 = vsub.f32 %v232, %v1405
    %1407 = vmatmul.f32.gmra.mxu0 %v1406
    %v1408 = vpop.f32.mrf.mxu0
    %v1409 = vadd.f32 %v1071, %v1408
    %v1410 = vand.u32 %v235, 4294901760
    %v1411 = vsub.f32 %v235, %v1410
    %1412 = vmatmul.f32.gmra.mxu0 %v1411
    %v1413 = vpop.f32.mrf.mxu0
    %v1414 = vadd.f32 %v1075, %v1413
    %v1415 = vand.u32 %v238, 4294901760
    %v1416 = vsub.f32 %v238, %v1415
    %1417 = vmatmul.f32.gmra.mxu0 %v1416
    %v1418 = vpop.f32.mrf.mxu0
    %v1419 = vadd.f32 %v1079, %v1418
    %v1420 = vand.u32 %v241, 4294901760
    %v1421 = vsub.f32 %v241, %v1420
    %1422 = vmatmul.f32.gmra.mxu0 %v1421
    %v1423 = vpop.f32.mrf.mxu0
    %v1424 = vadd.f32 %v1083, %v1423
    %v1425 = vand.u32 %v244, 4294901760
    %v1426 = vsub.f32 %v244, %v1425
    %1427 = vmatmul.f32.gmra.mxu0 %v1426
    %v1428 = vpop.f32.mrf.mxu0
    %v1429 = vadd.f32 %v1087, %v1428
    %v1430 = vand.u32 %v247, 4294901760
    %v1431 = vsub.f32 %v247, %v1430
    %1432 = vmatmul.f32.gmra.mxu0 %v1431
    %v1433 = vpop.f32.mrf.mxu0
    %v1434 = vadd.f32 %v1091, %v1433
    %v1435 = vand.u32 %v250, 4294901760
    %v1436 = vsub.f32 %v250, %v1435
    %1437 = vmatmul.f32.gmra.mxu0 %v1436
    %v1438 = vpop.f32.mrf.mxu0
    %v1439 = vadd.f32 %v1095, %v1438
    %v1440 = vand.u32 %v253, 4294901760
    %v1441 = vsub.f32 %v253, %v1440
    %1442 = vmatmul.f32.gmra.mxu0 %v1441
    %v1443 = vpop.f32.mrf.mxu0
    %v1444 = vadd.f32 %v1099, %v1443
    %v1445 = vand.u32 %v256, 4294901760
    %v1446 = vsub.f32 %v256, %v1445
    %1447 = vmatmul.f32.gmra.mxu0 %v1446
    %v1448 = vpop.f32.mrf.mxu0
    %v1449 = vadd.f32 %v1103, %v1448
    %v1450 = vand.u32 %v259, 4294901760
    %v1451 = vsub.f32 %v259, %v1450
    %1452 = vmatmul.f32.gmra.mxu0 %v1451
    %v1453 = vpop.f32.mrf.mxu0
    %v1454 = vadd.f32 %v1107, %v1453
    %v1455 = vand.u32 %v262, 4294901760
    %v1456 = vsub.f32 %v262, %v1455
    %1457 = vmatmul.f32.gmra.mxu0 %v1456
    %v1458 = vpop.f32.mrf.mxu0
    %v1459 = vadd.f32 %v1111, %v1458
    %v1460 = vand.u32 %v265, 4294901760
    %v1461 = vsub.f32 %v265, %v1460
    %1462 = vmatmul.f32.gmra.mxu0 %v1461
    %v1463 = vpop.f32.mrf.mxu0
    %v1464 = vadd.f32 %v1115, %v1463
    %v1465 = vand.u32 %v268, 4294901760
    %v1466 = vsub.f32 %v268, %v1465
    %1467 = vmatmul.f32.gmra.mxu0 %v1466
    %v1468 = vpop.f32.mrf.mxu0
    %v1469 = vadd.f32 %v1119, %v1468
    %v1470 = vand.u32 %v271, 4294901760
    %v1471 = vsub.f32 %v271, %v1470
    %1472 = vmatmul.f32.gmra.mxu0 %v1471
    %v1473 = vpop.f32.mrf.mxu0
    %v1474 = vadd.f32 %v1123, %v1473
    %v1475 = vand.u32 %v274, 4294901760
    %v1476 = vsub.f32 %v274, %v1475
    %1477 = vmatmul.f32.gmra.mxu0 %v1476
    %v1478 = vpop.f32.mrf.mxu0
    %v1479 = vadd.f32 %v1127, %v1478
    %v1480 = vand.u32 %v277, 4294901760
    %v1481 = vsub.f32 %v277, %v1480
    %1482 = vmatmul.f32.gmra.mxu0 %v1481
    %v1483 = vpop.f32.mrf.mxu0
    %v1484 = vadd.f32 %v1131, %v1483
    %v1485 = vand.u32 %v280, 4294901760
    %v1486 = vsub.f32 %v280, %v1485
    %1487 = vmatmul.f32.gmra.mxu0 %v1486
    %v1488 = vpop.f32.mrf.mxu0
    %v1489 = vadd.f32 %v1135, %v1488
    %v1490 = vand.u32 %v283, 4294901760
    %v1491 = vsub.f32 %v283, %v1490
    %1492 = vmatmul.f32.gmra.mxu0 %v1491
    %v1493 = vpop.f32.mrf.mxu0
    %v1494 = vadd.f32 %v1139, %v1493
    %1495 = vdwg.mxu0
    %1496 = vmatpush.msra.mxu0 0.0
    %1497 = vmatpush.msra.mxu0 0.0
    %1498 = vmatpush.msra.mxu0 0.0
    %1499 = vmatpush.msra.mxu0 0.0
    %1500 = vmatpush.msra.mxu0 0.0
    %1501 = vmatpush.msra.mxu0 0.0
    %1502 = vmatpush.msra.mxu0 0.0
    %v1503 = vand.u32 %v87, 4294901760
    %1504 = vmatpush.msra.mxu0 %v1503
    %v1505 = vand.u32 %v86, 4294901760
    %1506 = vmatpush.msra.mxu0 %v1505
    %v1507 = vand.u32 %v85, 4294901760
    %1508 = vmatpush.msra.mxu0 %v1507
    %v1509 = vand.u32 %v84, 4294901760
    %1510 = vmatpush.msra.mxu0 %v1509
    %v1511 = vand.u32 %v83, 4294901760
    %1512 = vmatpush.msra.mxu0 %v1511
    %v1513 = vand.u32 %v82, 4294901760
    %1514 = vmatpush.msra.mxu0 %v1513
    %v1515 = vand.u32 %v81, 4294901760
    %1516 = vmatpush.msra.mxu0 %v1515
    %v1517 = vand.u32 %v80, 4294901760
    %1518 = vmatpush.msra.mxu0 %v1517
    %v1519 = vand.u32 %v79, 4294901760
    %1520 = vmatpush.msra.mxu0 %v1519
    %v1521 = vand.u32 %v94, 4294901760
    %v1522 = vsub.f32 %v94, %v1521
    %v1523 = vand.u32 %v1522, 4294901760
    %1524 = vmatmul.f32.gmra.mxu0 %v1523
    %v1525 = vpop.f32.mrf.mxu0
    %v1526 = vadd.f32 %v1179, %v1525
    %v1527 = vand.u32 %v97, 4294901760
    %v1528 = vsub.f32 %v97, %v1527
    %v1529 = vand.u32 %v1528, 4294901760
    %1530 = vmatmul.f32.gmra.mxu0 %v1529
    %v1531 = vpop.f32.mrf.mxu0
    %v1532 = vadd.f32 %v1184, %v1531
    %v1533 = vand.u32 %v100, 4294901760
    %v1534 = vsub.f32 %v100, %v1533
    %v1535 = vand.u32 %v1534, 4294901760
    %1536 = vmatmul.f32.gmra.mxu0 %v1535
    %v1537 = vpop.f32.mrf.mxu0
    %v1538 = vadd.f32 %v1189, %v1537
    %v1539 = vand.u32 %v103, 4294901760
    %v1540 = vsub.f32 %v103, %v1539
    %v1541 = vand.u32 %v1540, 4294901760
    %1542 = vmatmul.f32.gmra.mxu0 %v1541
    %v1543 = vpop.f32.mrf.mxu0
    %v1544 = vadd.f32 %v1194, %v1543
    %v1545 = vand.u32 %v106, 4294901760
    %v1546 = vsub.f32 %v106, %v1545
    %v1547 = vand.u32 %v1546, 4294901760
    %1548 = vmatmul.f32.gmra.mxu0 %v1547
    %v1549 = vpop.f32.mrf.mxu0
    %v1550 = vadd.f32 %v1199, %v1549
    %v1551 = vand.u32 %v109, 4294901760
    %v1552 = vsub.f32 %v109, %v1551
    %v1553 = vand.u32 %v1552, 4294901760
    %1554 = vmatmul.f32.gmra.mxu0 %v1553
    %v1555 = vpop.f32.mrf.mxu0
    %v1556 = vadd.f32 %v1204, %v1555
    %v1557 = vand.u32 %v112, 4294901760
    %v1558 = vsub.f32 %v112, %v1557
    %v1559 = vand.u32 %v1558, 4294901760
    %1560 = vmatmul.f32.gmra.mxu0 %v1559
    %v1561 = vpop.f32.mrf.mxu0
    %v1562 = vadd.f32 %v1209, %v1561
    %v1563 = vand.u32 %v115, 4294901760
    %v1564 = vsub.f32 %v115, %v1563
    %v1565 = vand.u32 %v1564, 4294901760
    %1566 = vmatmul.f32.gmra.mxu0 %v1565
    %v1567 = vpop.f32.mrf.mxu0
    %v1568 = vadd.f32 %v1214, %v1567
    %v1569 = vand.u32 %v118, 4294901760
    %v1570 = vsub.f32 %v118, %v1569
    %v1571 = vand.u32 %v1570, 4294901760
    %1572 = vmatmul.f32.gmra.mxu0 %v1571
    %v1573 = vpop.f32.mrf.mxu0
    %v1574 = vadd.f32 %v1219, %v1573
    %v1575 = vand.u32 %v121, 4294901760
    %v1576 = vsub.f32 %v121, %v1575
    %v1577 = vand.u32 %v1576, 4294901760
    %1578 = vmatmul.f32.gmra.mxu0 %v1577
    %v1579 = vpop.f32.mrf.mxu0
    %v1580 = vadd.f32 %v1224, %v1579
    %v1581 = vand.u32 %v124, 4294901760
    %v1582 = vsub.f32 %v124, %v1581
    %v1583 = vand.u32 %v1582, 4294901760
    %1584 = vmatmul.f32.gmra.mxu0 %v1583
    %v1585 = vpop.f32.mrf.mxu0
    %v1586 = vadd.f32 %v1229, %v1585
    %v1587 = vand.u32 %v127, 4294901760
    %v1588 = vsub.f32 %v127, %v1587
    %v1589 = vand.u32 %v1588, 4294901760
    %1590 = vmatmul.f32.gmra.mxu0 %v1589
    %v1591 = vpop.f32.mrf.mxu0
    %v1592 = vadd.f32 %v1234, %v1591
    %v1593 = vand.u32 %v130, 4294901760
    %v1594 = vsub.f32 %v130, %v1593
    %v1595 = vand.u32 %v1594, 4294901760
    %1596 = vmatmul.f32.gmra.mxu0 %v1595
    %v1597 = vpop.f32.mrf.mxu0
    %v1598 = vadd.f32 %v1239, %v1597
    %v1599 = vand.u32 %v133, 4294901760
    %v1600 = vsub.f32 %v133, %v1599
    %v1601 = vand.u32 %v1600, 4294901760
    %1602 = vmatmul.f32.gmra.mxu0 %v1601
    %v1603 = vpop.f32.mrf.mxu0
    %v1604 = vadd.f32 %v1244, %v1603
    %v1605 = vand.u32 %v136, 4294901760
    %v1606 = vsub.f32 %v136, %v1605
    %v1607 = vand.u32 %v1606, 4294901760
    %1608 = vmatmul.f32.gmra.mxu0 %v1607
    %v1609 = vpop.f32.mrf.mxu0
    %v1610 = vadd.f32 %v1249, %v1609
    %v1611 = vand.u32 %v139, 4294901760
    %v1612 = vsub.f32 %v139, %v1611
    %v1613 = vand.u32 %v1612, 4294901760
    %1614 = vmatmul.f32.gmra.mxu0 %v1613
    %v1615 = vpop.f32.mrf.mxu0
    %v1616 = vadd.f32 %v1254, %v1615
    %v1617 = vand.u32 %v142, 4294901760
    %v1618 = vsub.f32 %v142, %v1617
    %v1619 = vand.u32 %v1618, 4294901760
    %1620 = vmatmul.f32.gmra.mxu0 %v1619
    %v1621 = vpop.f32.mrf.mxu0
    %v1622 = vadd.f32 %v1259, %v1621
    %v1623 = vand.u32 %v145, 4294901760
    %v1624 = vsub.f32 %v145, %v1623
    %v1625 = vand.u32 %v1624, 4294901760
    %1626 = vmatmul.f32.gmra.mxu0 %v1625
    %v1627 = vpop.f32.mrf.mxu0
    %v1628 = vadd.f32 %v1264, %v1627
    %v1629 = vand.u32 %v148, 4294901760
    %v1630 = vsub.f32 %v148, %v1629
    %v1631 = vand.u32 %v1630, 4294901760
    %1632 = vmatmul.f32.gmra.mxu0 %v1631
    %v1633 = vpop.f32.mrf.mxu0
    %v1634 = vadd.f32 %v1269, %v1633
    %v1635 = vand.u32 %v151, 4294901760
    %v1636 = vsub.f32 %v151, %v1635
    %v1637 = vand.u32 %v1636, 4294901760
    %1638 = vmatmul.f32.gmra.mxu0 %v1637
    %v1639 = vpop.f32.mrf.mxu0
    %v1640 = vadd.f32 %v1274, %v1639
    %v1641 = vand.u32 %v154, 4294901760
    %v1642 = vsub.f32 %v154, %v1641
    %v1643 = vand.u32 %v1642, 4294901760
    %1644 = vmatmul.f32.gmra.mxu0 %v1643
    %v1645 = vpop.f32.mrf.mxu0
    %v1646 = vadd.f32 %v1279, %v1645
    %v1647 = vand.u32 %v157, 4294901760
    %v1648 = vsub.f32 %v157, %v1647
    %v1649 = vand.u32 %v1648, 4294901760
    %1650 = vmatmul.f32.gmra.mxu0 %v1649
    %v1651 = vpop.f32.mrf.mxu0
    %v1652 = vadd.f32 %v1284, %v1651
    %v1653 = vand.u32 %v160, 4294901760
    %v1654 = vsub.f32 %v160, %v1653
    %v1655 = vand.u32 %v1654, 4294901760
    %1656 = vmatmul.f32.gmra.mxu0 %v1655
    %v1657 = vpop.f32.mrf.mxu0
    %v1658 = vadd.f32 %v1289, %v1657
    %v1659 = vand.u32 %v163, 4294901760
    %v1660 = vsub.f32 %v163, %v1659
    %v1661 = vand.u32 %v1660, 4294901760
    %1662 = vmatmul.f32.gmra.mxu0 %v1661
    %v1663 = vpop.f32.mrf.mxu0
    %v1664 = vadd.f32 %v1294, %v1663
    %v1665 = vand.u32 %v166, 4294901760
    %v1666 = vsub.f32 %v166, %v1665
    %v1667 = vand.u32 %v1666, 4294901760
    %1668 = vmatmul.f32.gmra.mxu0 %v1667
    %v1669 = vpop.f32.mrf.mxu0
    %v1670 = vadd.f32 %v1299, %v1669
    %v1671 = vand.u32 %v169, 4294901760
    %v1672 = vsub.f32 %v169, %v1671
    %v1673 = vand.u32 %v1672, 4294901760
    %1674 = vmatmul.f32.gmra.mxu0 %v1673
    %v1675 = vpop.f32.mrf.mxu0
    %v1676 = vadd.f32 %v1304, %v1675
    %v1677 = vand.u32 %v172, 4294901760
    %v1678 = vsub.f32 %v172, %v1677
    %v1679 = vand.u32 %v1678, 4294901760
    %1680 = vmatmul.f32.gmra.mxu0 %v1679
    %v1681 = vpop.f32.mrf.mxu0
    %v1682 = vadd.f32 %v1309, %v1681
    %v1683 = vand.u32 %v175, 4294901760
    %v1684 = vsub.f32 %v175, %v1683
    %v1685 = vand.u32 %v1684, 4294901760
    %1686 = vmatmul.f32.gmra.mxu0 %v1685
    %v1687 = vpop.f32.mrf.mxu0
    %v1688 = vadd.f32 %v1314, %v1687
    %v1689 = vand.u32 %v178, 4294901760
    %v1690 = vsub.f32 %v178, %v1689
    %v1691 = vand.u32 %v1690, 4294901760
    %1692 = vmatmul.f32.gmra.mxu0 %v1691
    %v1693 = vpop.f32.mrf.mxu0
    %v1694 = vadd.f32 %v1319, %v1693
    %v1695 = vand.u32 %v181, 4294901760
    %v1696 = vsub.f32 %v181, %v1695
    %v1697 = vand.u32 %v1696, 4294901760
    %1698 = vmatmul.f32.gmra.mxu0 %v1697
    %v1699 = vpop.f32.mrf.mxu0
    %v1700 = vadd.f32 %v1324, %v1699
    %v1701 = vand.u32 %v184, 4294901760
    %v1702 = vsub.f32 %v184, %v1701
    %v1703 = vand.u32 %v1702, 4294901760
    %1704 = vmatmul.f32.gmra.mxu0 %v1703
    %v1705 = vpop.f32.mrf.mxu0
    %v1706 = vadd.f32 %v1329, %v1705
    %v1707 = vand.u32 %v187, 4294901760
    %v1708 = vsub.f32 %v187, %v1707
    %v1709 = vand.u32 %v1708, 4294901760
    %1710 = vmatmul.f32.gmra.mxu0 %v1709
    %v1711 = vpop.f32.mrf.mxu0
    %v1712 = vadd.f32 %v1334, %v1711
    %v1713 = vand.u32 %v190, 4294901760
    %v1714 = vsub.f32 %v190, %v1713
    %v1715 = vand.u32 %v1714, 4294901760
    %1716 = vmatmul.f32.gmra.mxu0 %v1715
    %v1717 = vpop.f32.mrf.mxu0
    %v1718 = vadd.f32 %v1339, %v1717
    %v1719 = vand.u32 %v193, 4294901760
    %v1720 = vsub.f32 %v193, %v1719
    %v1721 = vand.u32 %v1720, 4294901760
    %1722 = vmatmul.f32.gmra.mxu0 %v1721
    %v1723 = vpop.f32.mrf.mxu0
    %v1724 = vadd.f32 %v1344, %v1723
    %v1725 = vand.u32 %v196, 4294901760
    %v1726 = vsub.f32 %v196, %v1725
    %v1727 = vand.u32 %v1726, 4294901760
    %1728 = vmatmul.f32.gmra.mxu0 %v1727
    %v1729 = vpop.f32.mrf.mxu0
    %v1730 = vadd.f32 %v1349, %v1729
    %v1731 = vand.u32 %v199, 4294901760
    %v1732 = vsub.f32 %v199, %v1731
    %v1733 = vand.u32 %v1732, 4294901760
    %1734 = vmatmul.f32.gmra.mxu0 %v1733
    %v1735 = vpop.f32.mrf.mxu0
    %v1736 = vadd.f32 %v1354, %v1735
    %v1737 = vand.u32 %v202, 4294901760
    %v1738 = vsub.f32 %v202, %v1737
    %v1739 = vand.u32 %v1738, 4294901760
    %1740 = vmatmul.f32.gmra.mxu0 %v1739
    %v1741 = vpop.f32.mrf.mxu0
    %v1742 = vadd.f32 %v1359, %v1741
    %v1743 = vand.u32 %v205, 4294901760
    %v1744 = vsub.f32 %v205, %v1743
    %v1745 = vand.u32 %v1744, 4294901760
    %1746 = vmatmul.f32.gmra.mxu0 %v1745
    %v1747 = vpop.f32.mrf.mxu0
    %v1748 = vadd.f32 %v1364, %v1747
    %v1749 = vand.u32 %v208, 4294901760
    %v1750 = vsub.f32 %v208, %v1749
    %v1751 = vand.u32 %v1750, 4294901760
    %1752 = vmatmul.f32.gmra.mxu0 %v1751
    %v1753 = vpop.f32.mrf.mxu0
    %v1754 = vadd.f32 %v1369, %v1753
    %v1755 = vand.u32 %v211, 4294901760
    %v1756 = vsub.f32 %v211, %v1755
    %v1757 = vand.u32 %v1756, 4294901760
    %1758 = vmatmul.f32.gmra.mxu0 %v1757
    %v1759 = vpop.f32.mrf.mxu0
    %v1760 = vadd.f32 %v1374, %v1759
    %v1761 = vand.u32 %v214, 4294901760
    %v1762 = vsub.f32 %v214, %v1761
    %v1763 = vand.u32 %v1762, 4294901760
    %1764 = vmatmul.f32.gmra.mxu0 %v1763
    %v1765 = vpop.f32.mrf.mxu0
    %v1766 = vadd.f32 %v1379, %v1765
    %v1767 = vand.u32 %v217, 4294901760
    %v1768 = vsub.f32 %v217, %v1767
    %v1769 = vand.u32 %v1768, 4294901760
    %1770 = vmatmul.f32.gmra.mxu0 %v1769
    %v1771 = vpop.f32.mrf.mxu0
    %v1772 = vadd.f32 %v1384, %v1771
    %v1773 = vand.u32 %v220, 4294901760
    %v1774 = vsub.f32 %v220, %v1773
    %v1775 = vand.u32 %v1774, 4294901760
    %1776 = vmatmul.f32.gmra.mxu0 %v1775
    %v1777 = vpop.f32.mrf.mxu0
    %v1778 = vadd.f32 %v1389, %v1777
    %v1779 = vand.u32 %v223, 4294901760
    %v1780 = vsub.f32 %v223, %v1779
    %v1781 = vand.u32 %v1780, 4294901760
    %1782 = vmatmul.f32.gmra.mxu0 %v1781
    %v1783 = vpop.f32.mrf.mxu0
    %v1784 = vadd.f32 %v1394, %v1783
    %v1785 = vand.u32 %v226, 4294901760
    %v1786 = vsub.f32 %v226, %v1785
    %v1787 = vand.u32 %v1786, 4294901760
    %1788 = vmatmul.f32.gmra.mxu0 %v1787
    %v1789 = vpop.f32.mrf.mxu0
    %v1790 = vadd.f32 %v1399, %v1789
    %v1791 = vand.u32 %v229, 4294901760
    %v1792 = vsub.f32 %v229, %v1791
    %v1793 = vand.u32 %v1792, 4294901760
    %1794 = vmatmul.f32.gmra.mxu0 %v1793
    %v1795 = vpop.f32.mrf.mxu0
    %v1796 = vadd.f32 %v1404, %v1795
    %v1797 = vand.u32 %v232, 4294901760
    %v1798 = vsub.f32 %v232, %v1797
    %v1799 = vand.u32 %v1798, 4294901760
    %1800 = vmatmul.f32.gmra.mxu0 %v1799
    %v1801 = vpop.f32.mrf.mxu0
    %v1802 = vadd.f32 %v1409, %v1801
    %v1803 = vand.u32 %v235, 4294901760
    %v1804 = vsub.f32 %v235, %v1803
    %v1805 = vand.u32 %v1804, 4294901760
    %1806 = vmatmul.f32.gmra.mxu0 %v1805
    %v1807 = vpop.f32.mrf.mxu0
    %v1808 = vadd.f32 %v1414, %v1807
    %v1809 = vand.u32 %v238, 4294901760
    %v1810 = vsub.f32 %v238, %v1809
    %v1811 = vand.u32 %v1810, 4294901760
    %1812 = vmatmul.f32.gmra.mxu0 %v1811
    %v1813 = vpop.f32.mrf.mxu0
    %v1814 = vadd.f32 %v1419, %v1813
    %v1815 = vand.u32 %v241, 4294901760
    %v1816 = vsub.f32 %v241, %v1815
    %v1817 = vand.u32 %v1816, 4294901760
    %1818 = vmatmul.f32.gmra.mxu0 %v1817
    %v1819 = vpop.f32.mrf.mxu0
    %v1820 = vadd.f32 %v1424, %v1819
    %v1821 = vand.u32 %v244, 4294901760
    %v1822 = vsub.f32 %v244, %v1821
    %v1823 = vand.u32 %v1822, 4294901760
    %1824 = vmatmul.f32.gmra.mxu0 %v1823
    %v1825 = vpop.f32.mrf.mxu0
    %v1826 = vadd.f32 %v1429, %v1825
    %v1827 = vand.u32 %v247, 4294901760
    %v1828 = vsub.f32 %v247, %v1827
    %v1829 = vand.u32 %v1828, 4294901760
    %1830 = vmatmul.f32.gmra.mxu0 %v1829
    %v1831 = vpop.f32.mrf.mxu0
    %v1832 = vadd.f32 %v1434, %v1831
    %v1833 = vand.u32 %v250, 4294901760
    %v1834 = vsub.f32 %v250, %v1833
    %v1835 = vand.u32 %v1834, 4294901760
    %1836 = vmatmul.f32.gmra.mxu0 %v1835
    %v1837 = vpop.f32.mrf.mxu0
    %v1838 = vadd.f32 %v1439, %v1837
    %v1839 = vand.u32 %v253, 4294901760
    %v1840 = vsub.f32 %v253, %v1839
    %v1841 = vand.u32 %v1840, 4294901760
    %1842 = vmatmul.f32.gmra.mxu0 %v1841
    %v1843 = vpop.f32.mrf.mxu0
    %v1844 = vadd.f32 %v1444, %v1843
    %v1845 = vand.u32 %v256, 4294901760
    %v1846 = vsub.f32 %v256, %v1845
    %v1847 = vand.u32 %v1846, 4294901760
    %1848 = vmatmul.f32.gmra.mxu0 %v1847
    %v1849 = vpop.f32.mrf.mxu0
    %v1850 = vadd.f32 %v1449, %v1849
    %v1851 = vand.u32 %v259, 4294901760
    %v1852 = vsub.f32 %v259, %v1851
    %v1853 = vand.u32 %v1852, 4294901760
    %1854 = vmatmul.f32.gmra.mxu0 %v1853
    %v1855 = vpop.f32.mrf.mxu0
    %v1856 = vadd.f32 %v1454, %v1855
    %v1857 = vand.u32 %v262, 4294901760
    %v1858 = vsub.f32 %v262, %v1857
    %v1859 = vand.u32 %v1858, 4294901760
    %1860 = vmatmul.f32.gmra.mxu0 %v1859
    %v1861 = vpop.f32.mrf.mxu0
    %v1862 = vadd.f32 %v1459, %v1861
    %v1863 = vand.u32 %v265, 4294901760
    %v1864 = vsub.f32 %v265, %v1863
    %v1865 = vand.u32 %v1864, 4294901760
    %1866 = vmatmul.f32.gmra.mxu0 %v1865
    %v1867 = vpop.f32.mrf.mxu0
    %v1868 = vadd.f32 %v1464, %v1867
    %v1869 = vand.u32 %v268, 4294901760
    %v1870 = vsub.f32 %v268, %v1869
    %v1871 = vand.u32 %v1870, 4294901760
    %1872 = vmatmul.f32.gmra.mxu0 %v1871
    %v1873 = vpop.f32.mrf.mxu0
    %v1874 = vadd.f32 %v1469, %v1873
    %v1875 = vand.u32 %v271, 4294901760
    %v1876 = vsub.f32 %v271, %v1875
    %v1877 = vand.u32 %v1876, 4294901760
    %1878 = vmatmul.f32.gmra.mxu0 %v1877
    %v1879 = vpop.f32.mrf.mxu0
    %v1880 = vadd.f32 %v1474, %v1879
    %v1881 = vand.u32 %v274, 4294901760
    %v1882 = vsub.f32 %v274, %v1881
    %v1883 = vand.u32 %v1882, 4294901760
    %1884 = vmatmul.f32.gmra.mxu0 %v1883
    %v1885 = vpop.f32.mrf.mxu0
    %v1886 = vadd.f32 %v1479, %v1885
    %v1887 = vand.u32 %v277, 4294901760
    %v1888 = vsub.f32 %v277, %v1887
    %v1889 = vand.u32 %v1888, 4294901760
    %1890 = vmatmul.f32.gmra.mxu0 %v1889
    %v1891 = vpop.f32.mrf.mxu0
    %v1892 = vadd.f32 %v1484, %v1891
    %v1893 = vand.u32 %v280, 4294901760
    %v1894 = vsub.f32 %v280, %v1893
    %v1895 = vand.u32 %v1894, 4294901760
    %1896 = vmatmul.f32.gmra.mxu0 %v1895
    %v1897 = vpop.f32.mrf.mxu0
    %v1898 = vadd.f32 %v1489, %v1897
    %v1899 = vand.u32 %v283, 4294901760
    %v1900 = vsub.f32 %v283, %v1899
    %v1901 = vand.u32 %v1900, 4294901760
    %1902 = vmatmul.f32.gmra.mxu0 %v1901
    %v1903 = vpop.f32.mrf.mxu0
    %v1904 = vadd.f32 %v1494, %v1903
    %1905 = vdwg.mxu0
    %1906 = vmatpush.msra.mxu0 0.0
    %1907 = vmatpush.msra.mxu0 0.0
    %1908 = vmatpush.msra.mxu0 0.0
    %1909 = vmatpush.msra.mxu0 0.0
    %1910 = vmatpush.msra.mxu0 0.0
    %1911 = vmatpush.msra.mxu0 0.0
    %1912 = vmatpush.msra.mxu0 0.0
    %v1913 = vand.u32 %v87, 4294901760
    %v1914 = vsub.f32 %v87, %v1913
    %v1915 = vand.u32 %v1914, 4294901760
    %1916 = vmatpush.msra.mxu0 %v1915
    %v1917 = vand.u32 %v86, 4294901760
    %v1918 = vsub.f32 %v86, %v1917
    %v1919 = vand.u32 %v1918, 4294901760
    %1920 = vmatpush.msra.mxu0 %v1919
    %v1921 = vand.u32 %v85, 4294901760
    %v1922 = vsub.f32 %v85, %v1921
    %v1923 = vand.u32 %v1922, 4294901760
    %1924 = vmatpush.msra.mxu0 %v1923
    %v1925 = vand.u32 %v84, 4294901760
    %v1926 = vsub.f32 %v84, %v1925
    %v1927 = vand.u32 %v1926, 4294901760
    %1928 = vmatpush.msra.mxu0 %v1927
    %v1929 = vand.u32 %v83, 4294901760
    %v1930 = vsub.f32 %v83, %v1929
    %v1931 = vand.u32 %v1930, 4294901760
    %1932 = vmatpush.msra.mxu0 %v1931
    %v1933 = vand.u32 %v82, 4294901760
    %v1934 = vsub.f32 %v82, %v1933
    %v1935 = vand.u32 %v1934, 4294901760
    %1936 = vmatpush.msra.mxu0 %v1935
    %v1937 = vand.u32 %v81, 4294901760
    %v1938 = vsub.f32 %v81, %v1937
    %v1939 = vand.u32 %v1938, 4294901760
    %1940 = vmatpush.msra.mxu0 %v1939
    %v1941 = vand.u32 %v80, 4294901760
    %v1942 = vsub.f32 %v80, %v1941
    %v1943 = vand.u32 %v1942, 4294901760
    %1944 = vmatpush.msra.mxu0 %v1943
    %v1945 = vand.u32 %v79, 4294901760
    %v1946 = vsub.f32 %v79, %v1945
    %v1947 = vand.u32 %v1946, 4294901760
    %1948 = vmatpush.msra.mxu0 %v1947
    %v1949 = vand.u32 %v94, 4294901760
    %1950 = vmatmul.f32.gmra.mxu0 %v1949
    %v1951 = vpop.f32.mrf.mxu0
    %v1952 = vadd.f32 %v1526, %v1951
    %v1953 = vand.u32 %v97, 4294901760
    %1954 = vmatmul.f32.gmra.mxu0 %v1953
    %v1955 = vpop.f32.mrf.mxu0
    %v1956 = vadd.f32 %v1532, %v1955
    %v1957 = vand.u32 %v100, 4294901760
    %1958 = vmatmul.f32.gmra.mxu0 %v1957
    %v1959 = vpop.f32.mrf.mxu0
    %v1960 = vadd.f32 %v1538, %v1959
    %v1961 = vand.u32 %v103, 4294901760
    %1962 = vmatmul.f32.gmra.mxu0 %v1961
    %v1963 = vpop.f32.mrf.mxu0
    %v1964 = vadd.f32 %v1544, %v1963
    %v1965 = vand.u32 %v106, 4294901760
    %1966 = vmatmul.f32.gmra.mxu0 %v1965
    %v1967 = vpop.f32.mrf.mxu0
    %v1968 = vadd.f32 %v1550, %v1967
    %v1969 = vand.u32 %v109, 4294901760
    %1970 = vmatmul.f32.gmra.mxu0 %v1969
    %v1971 = vpop.f32.mrf.mxu0
    %v1972 = vadd.f32 %v1556, %v1971
    %v1973 = vand.u32 %v112, 4294901760
    %1974 = vmatmul.f32.gmra.mxu0 %v1973
    %v1975 = vpop.f32.mrf.mxu0
    %v1976 = vadd.f32 %v1562, %v1975
    %v1977 = vand.u32 %v115, 4294901760
    %1978 = vmatmul.f32.gmra.mxu0 %v1977
    %v1979 = vpop.f32.mrf.mxu0
    %v1980 = vadd.f32 %v1568, %v1979
    %v1981 = vand.u32 %v118, 4294901760
    %1982 = vmatmul.f32.gmra.mxu0 %v1981
    %v1983 = vpop.f32.mrf.mxu0
    %v1984 = vadd.f32 %v1574, %v1983
    %v1985 = vand.u32 %v121, 4294901760
    %1986 = vmatmul.f32.gmra.mxu0 %v1985
    %v1987 = vpop.f32.mrf.mxu0
    %v1988 = vadd.f32 %v1580, %v1987
    %v1989 = vand.u32 %v124, 4294901760
    %1990 = vmatmul.f32.gmra.mxu0 %v1989
    %v1991 = vpop.f32.mrf.mxu0
    %v1992 = vadd.f32 %v1586, %v1991
    %v1993 = vand.u32 %v127, 4294901760
    %1994 = vmatmul.f32.gmra.mxu0 %v1993
    %v1995 = vpop.f32.mrf.mxu0
    %v1996 = vadd.f32 %v1592, %v1995
    %v1997 = vand.u32 %v130, 4294901760
    %1998 = vmatmul.f32.gmra.mxu0 %v1997
    %v1999 = vpop.f32.mrf.mxu0
    %v2000 = vadd.f32 %v1598, %v1999
    %v2001 = vand.u32 %v133, 4294901760
    %2002 = vmatmul.f32.gmra.mxu0 %v2001
    %v2003 = vpop.f32.mrf.mxu0
    %v2004 = vadd.f32 %v1604, %v2003
    %v2005 = vand.u32 %v136, 4294901760
    %2006 = vmatmul.f32.gmra.mxu0 %v2005
    %v2007 = vpop.f32.mrf.mxu0
    %v2008 = vadd.f32 %v1610, %v2007
    %v2009 = vand.u32 %v139, 4294901760
    %2010 = vmatmul.f32.gmra.mxu0 %v2009
    %v2011 = vpop.f32.mrf.mxu0
    %v2012 = vadd.f32 %v1616, %v2011
    %v2013 = vand.u32 %v142, 4294901760
    %2014 = vmatmul.f32.gmra.mxu0 %v2013
    %v2015 = vpop.f32.mrf.mxu0
    %v2016 = vadd.f32 %v1622, %v2015
    %v2017 = vand.u32 %v145, 4294901760
    %2018 = vmatmul.f32.gmra.mxu0 %v2017
    %v2019 = vpop.f32.mrf.mxu0
    %v2020 = vadd.f32 %v1628, %v2019
    %v2021 = vand.u32 %v148, 4294901760
    %2022 = vmatmul.f32.gmra.mxu0 %v2021
    %v2023 = vpop.f32.mrf.mxu0
    %v2024 = vadd.f32 %v1634, %v2023
    %v2025 = vand.u32 %v151, 4294901760
    %2026 = vmatmul.f32.gmra.mxu0 %v2025
    %v2027 = vpop.f32.mrf.mxu0
    %v2028 = vadd.f32 %v1640, %v2027
    %v2029 = vand.u32 %v154, 4294901760
    %2030 = vmatmul.f32.gmra.mxu0 %v2029
    %v2031 = vpop.f32.mrf.mxu0
    %v2032 = vadd.f32 %v1646, %v2031
    %v2033 = vand.u32 %v157, 4294901760
    %2034 = vmatmul.f32.gmra.mxu0 %v2033
    %v2035 = vpop.f32.mrf.mxu0
    %v2036 = vadd.f32 %v1652, %v2035
    %v2037 = vand.u32 %v160, 4294901760
    %2038 = vmatmul.f32.gmra.mxu0 %v2037
    %v2039 = vpop.f32.mrf.mxu0
    %v2040 = vadd.f32 %v1658, %v2039
    %v2041 = vand.u32 %v163, 4294901760
    %2042 = vmatmul.f32.gmra.mxu0 %v2041
    %v2043 = vpop.f32.mrf.mxu0
    %v2044 = vadd.f32 %v1664, %v2043
    %v2045 = vand.u32 %v166, 4294901760
    %2046 = vmatmul.f32.gmra.mxu0 %v2045
    %v2047 = vpop.f32.mrf.mxu0
    %v2048 = vadd.f32 %v1670, %v2047
    %v2049 = vand.u32 %v169, 4294901760
    %2050 = vmatmul.f32.gmra.mxu0 %v2049
    %v2051 = vpop.f32.mrf.mxu0
    %v2052 = vadd.f32 %v1676, %v2051
    %v2053 = vand.u32 %v172, 4294901760
    %2054 = vmatmul.f32.gmra.mxu0 %v2053
    %v2055 = vpop.f32.mrf.mxu0
    %v2056 = vadd.f32 %v1682, %v2055
    %v2057 = vand.u32 %v175, 4294901760
    %2058 = vmatmul.f32.gmra.mxu0 %v2057
    %v2059 = vpop.f32.mrf.mxu0
    %v2060 = vadd.f32 %v1688, %v2059
    %v2061 = vand.u32 %v178, 4294901760
    %2062 = vmatmul.f32.gmra.mxu0 %v2061
    %v2063 = vpop.f32.mrf.mxu0
    %v2064 = vadd.f32 %v1694, %v2063
    %v2065 = vand.u32 %v181, 4294901760
    %2066 = vmatmul.f32.gmra.mxu0 %v2065
    %v2067 = vpop.f32.mrf.mxu0
    %v2068 = vadd.f32 %v1700, %v2067
    %v2069 = vand.u32 %v184, 4294901760
    %2070 = vmatmul.f32.gmra.mxu0 %v2069
    %v2071 = vpop.f32.mrf.mxu0
    %v2072 = vadd.f32 %v1706, %v2071
    %v2073 = vand.u32 %v187, 4294901760
    %2074 = vmatmul.f32.gmra.mxu0 %v2073
    %v2075 = vpop.f32.mrf.mxu0
    %v2076 = vadd.f32 %v1712, %v2075
    %v2077 = vand.u32 %v190, 4294901760
    %2078 = vmatmul.f32.gmra.mxu0 %v2077
    %v2079 = vpop.f32.mrf.mxu0
    %v2080 = vadd.f32 %v1718, %v2079
    %v2081 = vand.u32 %v193, 4294901760
    %2082 = vmatmul.f32.gmra.mxu0 %v2081
    %v2083 = vpop.f32.mrf.mxu0
    %v2084 = vadd.f32 %v1724, %v2083
    %v2085 = vand.u32 %v196, 4294901760
    %2086 = vmatmul.f32.gmra.mxu0 %v2085
    %v2087 = vpop.f32.mrf.mxu0
    %v2088 = vadd.f32 %v1730, %v2087
    %v2089 = vand.u32 %v199, 4294901760
    %2090 = vmatmul.f32.gmra.mxu0 %v2089
    %v2091 = vpop.f32.mrf.mxu0
    %v2092 = vadd.f32 %v1736, %v2091
    %v2093 = vand.u32 %v202, 4294901760
    %2094 = vmatmul.f32.gmra.mxu0 %v2093
    %v2095 = vpop.f32.mrf.mxu0
    %v2096 = vadd.f32 %v1742, %v2095
    %v2097 = vand.u32 %v205, 4294901760
    %2098 = vmatmul.f32.gmra.mxu0 %v2097
    %v2099 = vpop.f32.mrf.mxu0
    %v2100 = vadd.f32 %v1748, %v2099
    %v2101 = vand.u32 %v208, 4294901760
    %2102 = vmatmul.f32.gmra.mxu0 %v2101
    %v2103 = vpop.f32.mrf.mxu0
    %v2104 = vadd.f32 %v1754, %v2103
    %v2105 = vand.u32 %v211, 4294901760
    %2106 = vmatmul.f32.gmra.mxu0 %v2105
    %v2107 = vpop.f32.mrf.mxu0
    %v2108 = vadd.f32 %v1760, %v2107
    %v2109 = vand.u32 %v214, 4294901760
    %2110 = vmatmul.f32.gmra.mxu0 %v2109
    %v2111 = vpop.f32.mrf.mxu0
    %v2112 = vadd.f32 %v1766, %v2111
    %v2113 = vand.u32 %v217, 4294901760
    %2114 = vmatmul.f32.gmra.mxu0 %v2113
    %v2115 = vpop.f32.mrf.mxu0
    %v2116 = vadd.f32 %v1772, %v2115
    %v2117 = vand.u32 %v220, 4294901760
    %2118 = vmatmul.f32.gmra.mxu0 %v2117
    %v2119 = vpop.f32.mrf.mxu0
    %v2120 = vadd.f32 %v1778, %v2119
    %v2121 = vand.u32 %v223, 4294901760
    %2122 = vmatmul.f32.gmra.mxu0 %v2121
    %v2123 = vpop.f32.mrf.mxu0
    %v2124 = vadd.f32 %v1784, %v2123
    %v2125 = vand.u32 %v226, 4294901760
    %2126 = vmatmul.f32.gmra.mxu0 %v2125
    %v2127 = vpop.f32.mrf.mxu0
    %v2128 = vadd.f32 %v1790, %v2127
    %v2129 = vand.u32 %v229, 4294901760
    %2130 = vmatmul.f32.gmra.mxu0 %v2129
    %v2131 = vpop.f32.mrf.mxu0
    %v2132 = vadd.f32 %v1796, %v2131
    %v2133 = vand.u32 %v232, 4294901760
    %2134 = vmatmul.f32.gmra.mxu0 %v2133
    %v2135 = vpop.f32.mrf.mxu0
    %v2136 = vadd.f32 %v1802, %v2135
    %v2137 = vand.u32 %v235, 4294901760
    %2138 = vmatmul.f32.gmra.mxu0 %v2137
    %v2139 = vpop.f32.mrf.mxu0
    %v2140 = vadd.f32 %v1808, %v2139
    %v2141 = vand.u32 %v238, 4294901760
    %2142 = vmatmul.f32.gmra.mxu0 %v2141
    %v2143 = vpop.f32.mrf.mxu0
    %v2144 = vadd.f32 %v1814, %v2143
    %v2145 = vand.u32 %v241, 4294901760
    %2146 = vmatmul.f32.gmra.mxu0 %v2145
    %v2147 = vpop.f32.mrf.mxu0
    %v2148 = vadd.f32 %v1820, %v2147
    %v2149 = vand.u32 %v244, 4294901760
    %2150 = vmatmul.f32.gmra.mxu0 %v2149
    %v2151 = vpop.f32.mrf.mxu0
    %v2152 = vadd.f32 %v1826, %v2151
    %v2153 = vand.u32 %v247, 4294901760
    %2154 = vmatmul.f32.gmra.mxu0 %v2153
    %v2155 = vpop.f32.mrf.mxu0
    %v2156 = vadd.f32 %v1832, %v2155
    %v2157 = vand.u32 %v250, 4294901760
    %2158 = vmatmul.f32.gmra.mxu0 %v2157
    %v2159 = vpop.f32.mrf.mxu0
    %v2160 = vadd.f32 %v1838, %v2159
    %v2161 = vand.u32 %v253, 4294901760
    %2162 = vmatmul.f32.gmra.mxu0 %v2161
    %v2163 = vpop.f32.mrf.mxu0
    %v2164 = vadd.f32 %v1844, %v2163
    %v2165 = vand.u32 %v256, 4294901760
    %2166 = vmatmul.f32.gmra.mxu0 %v2165
    %v2167 = vpop.f32.mrf.mxu0
    %v2168 = vadd.f32 %v1850, %v2167
    %v2169 = vand.u32 %v259, 4294901760
    %2170 = vmatmul.f32.gmra.mxu0 %v2169
    %v2171 = vpop.f32.mrf.mxu0
    %v2172 = vadd.f32 %v1856, %v2171
    %v2173 = vand.u32 %v262, 4294901760
    %2174 = vmatmul.f32.gmra.mxu0 %v2173
    %v2175 = vpop.f32.mrf.mxu0
    %v2176 = vadd.f32 %v1862, %v2175
    %v2177 = vand.u32 %v265, 4294901760
    %2178 = vmatmul.f32.gmra.mxu0 %v2177
    %v2179 = vpop.f32.mrf.mxu0
    %v2180 = vadd.f32 %v1868, %v2179
    %v2181 = vand.u32 %v268, 4294901760
    %2182 = vmatmul.f32.gmra.mxu0 %v2181
    %v2183 = vpop.f32.mrf.mxu0
    %v2184 = vadd.f32 %v1874, %v2183
    %v2185 = vand.u32 %v271, 4294901760
    %2186 = vmatmul.f32.gmra.mxu0 %v2185
    %v2187 = vpop.f32.mrf.mxu0
    %v2188 = vadd.f32 %v1880, %v2187
    %v2189 = vand.u32 %v274, 4294901760
    %2190 = vmatmul.f32.gmra.mxu0 %v2189
    %v2191 = vpop.f32.mrf.mxu0
    %v2192 = vadd.f32 %v1886, %v2191
    %v2193 = vand.u32 %v277, 4294901760
    %2194 = vmatmul.f32.gmra.mxu0 %v2193
    %v2195 = vpop.f32.mrf.mxu0
    %v2196 = vadd.f32 %v1892, %v2195
    %v2197 = vand.u32 %v280, 4294901760
    %2198 = vmatmul.f32.gmra.mxu0 %v2197
    %v2199 = vpop.f32.mrf.mxu0
    %v2200 = vadd.f32 %v1898, %v2199
    %v2201 = vand.u32 %v283, 4294901760
    %2202 = vmatmul.f32.gmra.mxu0 %v2201
    %v2203 = vpop.f32.mrf.mxu0
    %v2204 = vadd.f32 %v1904, %v2203
    %2205 = vdwg.mxu0
    %2206 = vmatpush.msra.mxu0 0.0
    %2207 = vmatpush.msra.mxu0 0.0
    %2208 = vmatpush.msra.mxu0 0.0
    %2209 = vmatpush.msra.mxu0 0.0
    %2210 = vmatpush.msra.mxu0 0.0
    %2211 = vmatpush.msra.mxu0 0.0
    %2212 = vmatpush.msra.mxu0 0.0
    %v2213 = vand.u32 %v87, 4294901760
    %2214 = vmatpush.msra.mxu0 %v2213
    %v2215 = vand.u32 %v86, 4294901760
    %2216 = vmatpush.msra.mxu0 %v2215
    %v2217 = vand.u32 %v85, 4294901760
    %2218 = vmatpush.msra.mxu0 %v2217
    %v2219 = vand.u32 %v84, 4294901760
    %2220 = vmatpush.msra.mxu0 %v2219
    %v2221 = vand.u32 %v83, 4294901760
    %2222 = vmatpush.msra.mxu0 %v2221
    %v2223 = vand.u32 %v82, 4294901760
    %2224 = vmatpush.msra.mxu0 %v2223
    %v2225 = vand.u32 %v81, 4294901760
    %2226 = vmatpush.msra.mxu0 %v2225
    %v2227 = vand.u32 %v80, 4294901760
    %2228 = vmatpush.msra.mxu0 %v2227
    %v2229 = vand.u32 %v79, 4294901760
    %2230 = vmatpush.msra.mxu0 %v2229
    %v2231 = vand.u32 %v94, 4294901760
    %2232 = vmatmul.f32.gmra.mxu0 %v2231
    %v2233 = vpop.f32.mrf.mxu0
    %v2234 = vadd.f32 %v1952, %v2233
    %v2235 = vand.u32 %v97, 4294901760
    %2236 = vmatmul.f32.gmra.mxu0 %v2235
    %v2237 = vpop.f32.mrf.mxu0
    %v2238 = vadd.f32 %v1956, %v2237
    %v2239 = vand.u32 %v100, 4294901760
    %2240 = vmatmul.f32.gmra.mxu0 %v2239
    %v2241 = vpop.f32.mrf.mxu0
    %v2242 = vadd.f32 %v1960, %v2241
    %v2243 = vand.u32 %v103, 4294901760
    %2244 = vmatmul.f32.gmra.mxu0 %v2243
    %v2245 = vpop.f32.mrf.mxu0
    %v2246 = vadd.f32 %v1964, %v2245
    %v2247 = vand.u32 %v106, 4294901760
    %2248 = vmatmul.f32.gmra.mxu0 %v2247
    %v2249 = vpop.f32.mrf.mxu0
    %v2250 = vadd.f32 %v1968, %v2249
    %v2251 = vand.u32 %v109, 4294901760
    %2252 = vmatmul.f32.gmra.mxu0 %v2251
    %v2253 = vpop.f32.mrf.mxu0
    %v2254 = vadd.f32 %v1972, %v2253
    %v2255 = vand.u32 %v112, 4294901760
    %2256 = vmatmul.f32.gmra.mxu0 %v2255
    %v2257 = vpop.f32.mrf.mxu0
    %v2258 = vadd.f32 %v1976, %v2257
    %v2259 = vand.u32 %v115, 4294901760
    %2260 = vmatmul.f32.gmra.mxu0 %v2259
    %v2261 = vpop.f32.mrf.mxu0
    %v2262 = vadd.f32 %v1980, %v2261
    %v2263 = vand.u32 %v118, 4294901760
    %2264 = vmatmul.f32.gmra.mxu0 %v2263
    %v2265 = vpop.f32.mrf.mxu0
    %v2266 = vadd.f32 %v1984, %v2265
    %v2267 = vand.u32 %v121, 4294901760
    %2268 = vmatmul.f32.gmra.mxu0 %v2267
    %v2269 = vpop.f32.mrf.mxu0
    %v2270 = vadd.f32 %v1988, %v2269
    %v2271 = vand.u32 %v124, 4294901760
    %2272 = vmatmul.f32.gmra.mxu0 %v2271
    %v2273 = vpop.f32.mrf.mxu0
    %v2274 = vadd.f32 %v1992, %v2273
    %v2275 = vand.u32 %v127, 4294901760
    %2276 = vmatmul.f32.gmra.mxu0 %v2275
    %v2277 = vpop.f32.mrf.mxu0
    %v2278 = vadd.f32 %v1996, %v2277
    %v2279 = vand.u32 %v130, 4294901760
    %2280 = vmatmul.f32.gmra.mxu0 %v2279
    %v2281 = vpop.f32.mrf.mxu0
    %v2282 = vadd.f32 %v2000, %v2281
    %v2283 = vand.u32 %v133, 4294901760
    %2284 = vmatmul.f32.gmra.mxu0 %v2283
    %v2285 = vpop.f32.mrf.mxu0
    %v2286 = vadd.f32 %v2004, %v2285
    %v2287 = vand.u32 %v136, 4294901760
    %2288 = vmatmul.f32.gmra.mxu0 %v2287
    %v2289 = vpop.f32.mrf.mxu0
    %v2290 = vadd.f32 %v2008, %v2289
    %v2291 = vand.u32 %v139, 4294901760
    %2292 = vmatmul.f32.gmra.mxu0 %v2291
    %v2293 = vpop.f32.mrf.mxu0
    %v2294 = vadd.f32 %v2012, %v2293
    %v2295 = vand.u32 %v142, 4294901760
    %2296 = vmatmul.f32.gmra.mxu0 %v2295
    %v2297 = vpop.f32.mrf.mxu0
    %v2298 = vadd.f32 %v2016, %v2297
    %v2299 = vand.u32 %v145, 4294901760
    %2300 = vmatmul.f32.gmra.mxu0 %v2299
    %v2301 = vpop.f32.mrf.mxu0
    %v2302 = vadd.f32 %v2020, %v2301
    %v2303 = vand.u32 %v148, 4294901760
    %2304 = vmatmul.f32.gmra.mxu0 %v2303
    %v2305 = vpop.f32.mrf.mxu0
    %v2306 = vadd.f32 %v2024, %v2305
    %v2307 = vand.u32 %v151, 4294901760
    %2308 = vmatmul.f32.gmra.mxu0 %v2307
    %v2309 = vpop.f32.mrf.mxu0
    %v2310 = vadd.f32 %v2028, %v2309
    %v2311 = vand.u32 %v154, 4294901760
    %2312 = vmatmul.f32.gmra.mxu0 %v2311
    %v2313 = vpop.f32.mrf.mxu0
    %v2314 = vadd.f32 %v2032, %v2313
    %v2315 = vand.u32 %v157, 4294901760
    %2316 = vmatmul.f32.gmra.mxu0 %v2315
    %v2317 = vpop.f32.mrf.mxu0
    %v2318 = vadd.f32 %v2036, %v2317
    %v2319 = vand.u32 %v160, 4294901760
    %2320 = vmatmul.f32.gmra.mxu0 %v2319
    %v2321 = vpop.f32.mrf.mxu0
    %v2322 = vadd.f32 %v2040, %v2321
    %v2323 = vand.u32 %v163, 4294901760
    %2324 = vmatmul.f32.gmra.mxu0 %v2323
    %v2325 = vpop.f32.mrf.mxu0
    %v2326 = vadd.f32 %v2044, %v2325
    %v2327 = vand.u32 %v166, 4294901760
    %2328 = vmatmul.f32.gmra.mxu0 %v2327
    %v2329 = vpop.f32.mrf.mxu0
    %v2330 = vadd.f32 %v2048, %v2329
    %v2331 = vand.u32 %v169, 4294901760
    %2332 = vmatmul.f32.gmra.mxu0 %v2331
    %v2333 = vpop.f32.mrf.mxu0
    %v2334 = vadd.f32 %v2052, %v2333
    %v2335 = vand.u32 %v172, 4294901760
    %2336 = vmatmul.f32.gmra.mxu0 %v2335
    %v2337 = vpop.f32.mrf.mxu0
    %v2338 = vadd.f32 %v2056, %v2337
    %v2339 = vand.u32 %v175, 4294901760
    %2340 = vmatmul.f32.gmra.mxu0 %v2339
    %v2341 = vpop.f32.mrf.mxu0
    %v2342 = vadd.f32 %v2060, %v2341
    %v2343 = vand.u32 %v178, 4294901760
    %2344 = vmatmul.f32.gmra.mxu0 %v2343
    %v2345 = vpop.f32.mrf.mxu0
    %v2346 = vadd.f32 %v2064, %v2345
    %v2347 = vand.u32 %v181, 4294901760
    %2348 = vmatmul.f32.gmra.mxu0 %v2347
    %v2349 = vpop.f32.mrf.mxu0
    %v2350 = vadd.f32 %v2068, %v2349
    %v2351 = vand.u32 %v184, 4294901760
    %2352 = vmatmul.f32.gmra.mxu0 %v2351
    %v2353 = vpop.f32.mrf.mxu0
    %v2354 = vadd.f32 %v2072, %v2353
    %v2355 = vand.u32 %v187, 4294901760
    %2356 = vmatmul.f32.gmra.mxu0 %v2355
    %v2357 = vpop.f32.mrf.mxu0
    %v2358 = vadd.f32 %v2076, %v2357
    %v2359 = vand.u32 %v190, 4294901760
    %2360 = vmatmul.f32.gmra.mxu0 %v2359
    %v2361 = vpop.f32.mrf.mxu0
    %v2362 = vadd.f32 %v2080, %v2361
    %v2363 = vand.u32 %v193, 4294901760
    %2364 = vmatmul.f32.gmra.mxu0 %v2363
    %v2365 = vpop.f32.mrf.mxu0
    %v2366 = vadd.f32 %v2084, %v2365
    %v2367 = vand.u32 %v196, 4294901760
    %2368 = vmatmul.f32.gmra.mxu0 %v2367
    %v2369 = vpop.f32.mrf.mxu0
    %v2370 = vadd.f32 %v2088, %v2369
    %v2371 = vand.u32 %v199, 4294901760
    %2372 = vmatmul.f32.gmra.mxu0 %v2371
    %v2373 = vpop.f32.mrf.mxu0
    %v2374 = vadd.f32 %v2092, %v2373
    %v2375 = vand.u32 %v202, 4294901760
    %2376 = vmatmul.f32.gmra.mxu0 %v2375
    %v2377 = vpop.f32.mrf.mxu0
    %v2378 = vadd.f32 %v2096, %v2377
    %v2379 = vand.u32 %v205, 4294901760
    %2380 = vmatmul.f32.gmra.mxu0 %v2379
    %v2381 = vpop.f32.mrf.mxu0
    %v2382 = vadd.f32 %v2100, %v2381
    %v2383 = vand.u32 %v208, 4294901760
    %2384 = vmatmul.f32.gmra.mxu0 %v2383
    %v2385 = vpop.f32.mrf.mxu0
    %v2386 = vadd.f32 %v2104, %v2385
    %v2387 = vand.u32 %v211, 4294901760
    %2388 = vmatmul.f32.gmra.mxu0 %v2387
    %v2389 = vpop.f32.mrf.mxu0
    %v2390 = vadd.f32 %v2108, %v2389
    %v2391 = vand.u32 %v214, 4294901760
    %2392 = vmatmul.f32.gmra.mxu0 %v2391
    %v2393 = vpop.f32.mrf.mxu0
    %v2394 = vadd.f32 %v2112, %v2393
    %v2395 = vand.u32 %v217, 4294901760
    %2396 = vmatmul.f32.gmra.mxu0 %v2395
    %v2397 = vpop.f32.mrf.mxu0
    %v2398 = vadd.f32 %v2116, %v2397
    %v2399 = vand.u32 %v220, 4294901760
    %2400 = vmatmul.f32.gmra.mxu0 %v2399
    %v2401 = vpop.f32.mrf.mxu0
    %v2402 = vadd.f32 %v2120, %v2401
    %v2403 = vand.u32 %v223, 4294901760
    %2404 = vmatmul.f32.gmra.mxu0 %v2403
    %v2405 = vpop.f32.mrf.mxu0
    %v2406 = vadd.f32 %v2124, %v2405
    %v2407 = vand.u32 %v226, 4294901760
    %2408 = vmatmul.f32.gmra.mxu0 %v2407
    %v2409 = vpop.f32.mrf.mxu0
    %v2410 = vadd.f32 %v2128, %v2409
    %v2411 = vand.u32 %v229, 4294901760
    %2412 = vmatmul.f32.gmra.mxu0 %v2411
    %v2413 = vpop.f32.mrf.mxu0
    %v2414 = vadd.f32 %v2132, %v2413
    %v2415 = vand.u32 %v232, 4294901760
    %2416 = vmatmul.f32.gmra.mxu0 %v2415
    %v2417 = vpop.f32.mrf.mxu0
    %v2418 = vadd.f32 %v2136, %v2417
    %v2419 = vand.u32 %v235, 4294901760
    %2420 = vmatmul.f32.gmra.mxu0 %v2419
    %v2421 = vpop.f32.mrf.mxu0
    %v2422 = vadd.f32 %v2140, %v2421
    %v2423 = vand.u32 %v238, 4294901760
    %2424 = vmatmul.f32.gmra.mxu0 %v2423
    %v2425 = vpop.f32.mrf.mxu0
    %v2426 = vadd.f32 %v2144, %v2425
    %v2427 = vand.u32 %v241, 4294901760
    %2428 = vmatmul.f32.gmra.mxu0 %v2427
    %v2429 = vpop.f32.mrf.mxu0
    %v2430 = vadd.f32 %v2148, %v2429
    %v2431 = vand.u32 %v244, 4294901760
    %2432 = vmatmul.f32.gmra.mxu0 %v2431
    %v2433 = vpop.f32.mrf.mxu0
    %v2434 = vadd.f32 %v2152, %v2433
    %v2435 = vand.u32 %v247, 4294901760
    %2436 = vmatmul.f32.gmra.mxu0 %v2435
    %v2437 = vpop.f32.mrf.mxu0
    %v2438 = vadd.f32 %v2156, %v2437
    %v2439 = vand.u32 %v250, 4294901760
    %2440 = vmatmul.f32.gmra.mxu0 %v2439
    %v2441 = vpop.f32.mrf.mxu0
    %v2442 = vadd.f32 %v2160, %v2441
    %v2443 = vand.u32 %v253, 4294901760
    %2444 = vmatmul.f32.gmra.mxu0 %v2443
    %v2445 = vpop.f32.mrf.mxu0
    %v2446 = vadd.f32 %v2164, %v2445
    %v2447 = vand.u32 %v256, 4294901760
    %2448 = vmatmul.f32.gmra.mxu0 %v2447
    %v2449 = vpop.f32.mrf.mxu0
    %v2450 = vadd.f32 %v2168, %v2449
    %v2451 = vand.u32 %v259, 4294901760
    %2452 = vmatmul.f32.gmra.mxu0 %v2451
    %v2453 = vpop.f32.mrf.mxu0
    %v2454 = vadd.f32 %v2172, %v2453
    %v2455 = vand.u32 %v262, 4294901760
    %2456 = vmatmul.f32.gmra.mxu0 %v2455
    %v2457 = vpop.f32.mrf.mxu0
    %v2458 = vadd.f32 %v2176, %v2457
    %v2459 = vand.u32 %v265, 4294901760
    %2460 = vmatmul.f32.gmra.mxu0 %v2459
    %v2461 = vpop.f32.mrf.mxu0
    %v2462 = vadd.f32 %v2180, %v2461
    %v2463 = vand.u32 %v268, 4294901760
    %2464 = vmatmul.f32.gmra.mxu0 %v2463
    %v2465 = vpop.f32.mrf.mxu0
    %v2466 = vadd.f32 %v2184, %v2465
    %v2467 = vand.u32 %v271, 4294901760
    %2468 = vmatmul.f32.gmra.mxu0 %v2467
    %v2469 = vpop.f32.mrf.mxu0
    %v2470 = vadd.f32 %v2188, %v2469
    %v2471 = vand.u32 %v274, 4294901760
    %2472 = vmatmul.f32.gmra.mxu0 %v2471
    %v2473 = vpop.f32.mrf.mxu0
    %v2474 = vadd.f32 %v2192, %v2473
    %v2475 = vand.u32 %v277, 4294901760
    %2476 = vmatmul.f32.gmra.mxu0 %v2475
    %v2477 = vpop.f32.mrf.mxu0
    %v2478 = vadd.f32 %v2196, %v2477
    %v2479 = vand.u32 %v280, 4294901760
    %2480 = vmatmul.f32.gmra.mxu0 %v2479
    %v2481 = vpop.f32.mrf.mxu0
    %v2482 = vadd.f32 %v2200, %v2481
    %v2483 = vand.u32 %v283, 4294901760
    %2484 = vmatmul.f32.gmra.mxu0 %v2483
    %v2485 = vpop.f32.mrf.mxu0
    %v2486 = vadd.f32 %v2204, %v2485
    %2487 = vdwg.mxu0
    %2488 = vst [vmem:[#allocation2] sm:$0xff] %v2234
    %2489 = vst [vmem:[#allocation2 + $0x8] sm:$0xff] %v2238
    %2490 = vst [vmem:[#allocation2 + $0x10] sm:$0xff] %v2242
    %2491 = vst [vmem:[#allocation2 + $0x18] sm:$0xff] %v2246
    %2492 = vst [vmem:[#allocation2 + $0x20] sm:$0xff] %v2250
    %2493 = vst [vmem:[#allocation2 + $0x28] sm:$0xff] %v2254
    %2494 = vst [vmem:[#allocation2 + $0x30] sm:$0xff] %v2258
    %2495 = vst [vmem:[#allocation2 + $0x38] sm:$0xff] %v2262
    %2496 = vst [vmem:[#allocation2 + $0x40] sm:$0xff] %v2266
    %2497 = vst [vmem:[#allocation2 + $0x48] sm:$0xff] %v2270
    %2498 = vst [vmem:[#allocation2 + $0x50] sm:$0xff] %v2274
    %2499 = vst [vmem:[#allocation2 + $0x58] sm:$0xff] %v2278
    %2500 = vst [vmem:[#allocation2 + $0x60] sm:$0xff] %v2282
    %2501 = vst [vmem:[#allocation2 + $0x68] sm:$0xff] %v2286
    %2502 = vst [vmem:[#allocation2 + $0x70] sm:$0xff] %v2290
    %2503 = vst [vmem:[#allocation2 + $0x78] sm:$0xff] %v2294
    %2504 = vst [vmem:[#allocation2 + $0x80] sm:$0xff] %v2298
    %2505 = vst [vmem:[#allocation2 + $0x88] sm:$0xff] %v2302
    %2506 = vst [vmem:[#allocation2 + $0x90] sm:$0xff] %v2306
    %2507 = vst [vmem:[#allocation2 + $0x98] sm:$0xff] %v2310
    %2508 = vst [vmem:[#allocation2 + $0xa0] sm:$0xff] %v2314
    %2509 = vst [vmem:[#allocation2 + $0xa8] sm:$0xff] %v2318
    %2510 = vst [vmem:[#allocation2 + $0xb0] sm:$0xff] %v2322
    %2511 = vst [vmem:[#allocation2 + $0xb8] sm:$0xff] %v2326
    %2512 = vst [vmem:[#allocation2 + $0xc0] sm:$0xff] %v2330
    %2513 = vst [vmem:[#allocation2 + $0xc8] sm:$0xff] %v2334
    %2514 = vst [vmem:[#allocation2 + $0xd0] sm:$0xff] %v2338
    %2515 = vst [vmem:[#allocation2 + $0xd8] sm:$0xff] %v2342
    %2516 = vst [vmem:[#allocation2 + $0xe0] sm:$0xff] %v2346
    %2517 = vst [vmem:[#allocation2 + $0xe8] sm:$0xff] %v2350
    %2518 = vst [vmem:[#allocation2 + $0xf0] sm:$0xff] %v2354
    %2519 = vst [vmem:[#allocation2 + $0xf8] sm:$0xff] %v2358
    %2520 = vst [vmem:[#allocation2 + $0x100] sm:$0xff] %v2362
    %2521 = vst [vmem:[#allocation2 + $0x108] sm:$0xff] %v2366
    %2522 = vst [vmem:[#allocation2 + $0x110] sm:$0xff] %v2370
    %2523 = vst [vmem:[#allocation2 + $0x118] sm:$0xff] %v2374
    %2524 = vst [vmem:[#allocation2 + $0x120] sm:$0xff] %v2378
    %2525 = vst [vmem:[#allocation2 + $0x128] sm:$0xff] %v2382
    %2526 = vst [vmem:[#allocation2 + $0x130] sm:$0xff] %v2386
    %2527 = vst [vmem:[#allocation2 + $0x138] sm:$0xff] %v2390
    %2528 = vst [vmem:[#allocation2 + $0x140] sm:$0xff] %v2394
    %2529 = vst [vmem:[#allocation2 + $0x148] sm:$0xff] %v2398
    %2530 = vst [vmem:[#allocation2 + $0x150] sm:$0xff] %v2402
    %2531 = vst [vmem:[#allocation2 + $0x158] sm:$0xff] %v2406
    %2532 = vst [vmem:[#allocation2 + $0x160] sm:$0xff] %v2410
    %2533 = vst [vmem:[#allocation2 + $0x168] sm:$0xff] %v2414
    %2534 = vst [vmem:[#allocation2 + $0x170] sm:$0xff] %v2418
    %2535 = vst [vmem:[#allocation2 + $0x178] sm:$0xff] %v2422
    %2536 = vst [vmem:[#allocation2 + $0x180] sm:$0xff] %v2426
    %2537 = vst [vmem:[#allocation2 + $0x188] sm:$0xff] %v2430
    %2538 = vst [vmem:[#allocation2 + $0x190] sm:$0xff] %v2434
    %2539 = vst [vmem:[#allocation2 + $0x198] sm:$0xff] %v2438
    %2540 = vst [vmem:[#allocation2 + $0x1a0] sm:$0xff] %v2442
    %2541 = vst [vmem:[#allocation2 + $0x1a8] sm:$0xff] %v2446
    %2542 = vst [vmem:[#allocation2 + $0x1b0] sm:$0xff] %v2450
    %2543 = vst [vmem:[#allocation2 + $0x1b8] sm:$0xff] %v2454
    %2544 = vst [vmem:[#allocation2 + $0x1c0] sm:$0xff] %v2458
    %2545 = vst [vmem:[#allocation2 + $0x1c8] sm:$0xff] %v2462
    %2546 = vst [vmem:[#allocation2 + $0x1d0] sm:$0xff] %v2466
    %2547 = vst [vmem:[#allocation2 + $0x1d8] sm:$0xff] %v2470
    %2548 = vst [vmem:[#allocation2 + $0x1e0] sm:$0xff] %v2474
    %2549 = vst [vmem:[#allocation2 + $0x1e8] sm:$0xff] %v2478
    %2550 = vst [vmem:[#allocation2 + $0x1f0] sm:$0xff] %v2482
    %2551 = vst [vmem:[#allocation2 + $0x1f8] sm:$0xff] %v2486
    // Predicated region
    $region14: #{tpu_custom_call.1} parent=1 // pred_check
      _
    $region15: #{tpu_custom_call.1} parent=1 // pred_check_branch
      %2553 = sbr.rel (0) target = $region17
    $region16: #{tpu_custom_call.1} parent=1 // pred_region
      %2555 = vsyncadd [#allocation3], 0
      %s2556 = sshll.u32 [#allocation2], 4
      %s2557 = int_to_ptr.vmem [resolvable:$true] %s2556
      %s2558 = sshll.u32 %s3, 4
      %s2559 = int_to_ptr.hbm [resolvable:$true] %s2558
      %2564 = dma.vmem_to_hbm [thread:$0]  %s2557, 8192, %s2559, [#allocation3], 128, 128, 8
    $region17: #{tpu_custom_call.1} parent=1 // pred_fallthru
      _
    // Predicated region
    $region18: #{tpu_custom_call.1} parent=1 // pred_check
      _
    $region19: #{tpu_custom_call.1} parent=1 // pred_check_branch
      %2566 = sbr.rel (0) target = $region21
    $region20: #{tpu_custom_call.1} parent=1 // pred_region
      %2568 = dma.done [#allocation3], 8192
    $region21: #{tpu_custom_call.1} parent=1 // pred_fallthru
      _
    %2569 = vsyncpa [#allocation3], 1

</llo_original>
